<compile_context>
chip_gen: v7x
topology: tpu7x:2x2x1
jax: 0.10.0
libtpu: 0.0.40
codegen_flags: <defaults>
</compile_context>

<pallas_src>
import functools

import jax
import jax.numpy as jnp
import numpy as np
from jax.experimental import pallas as pl
from jax.experimental.pallas import tpu as pltpu

ACT_DTYPE = jnp.bfloat16        # MXU operand dtype (accumulation stays f32)
_PAD = 128                      # lane-aligned zero pad for the flat conv rows


# --------------------------------------------------------------------------
# Fused per-image kernel (channels on sublanes, flattened H*W on lanes)
# --------------------------------------------------------------------------
def _c2f_saconv_kernel(x_ref, colf_ref, poolm_ref,
                       w1_ref, b1_ref, wm_ref, bm_ref,
                       prew_ref, preb_ref, sww_ref, swb_ref,
                       ws_ref, wl_ref, postw_ref, postb_ref,
                       w2_ref, b2_ref, o_ref, *, c, H, W):
    L = H * W
    inv_L = 1.0 / float(L)
    colf = colf_ref[...]                                    # (1, L) column idx (f32)

    def silu(v):
        return v * jax.nn.sigmoid(v)

    def padded(v):
        # 128-lane-aligned zero extension of a compact flat row (tile-aligned concat).
        z = jnp.zeros((v.shape[0], _PAD), jnp.float32)
        return jnp.concatenate([z, v, z], axis=1)           # (rows, L + 2*_PAD)

    def conv3x3(vp, w2d, d):
        """'same' 3x3 conv (dilation d) on the zero-extended flat input via a
        single im2col matmul: (cout, 9*cin) @ (9*cin, L)."""
        taps = []
        for dh in (-1, 0, 1):
            for dw in (-1, 0, 1):
                start = _PAD + d * (dh * W + dw)
                t = vp[:, start:start + L]
                if dw == -1:                                 # left column(s) out of image
                    t = jnp.where(colf >= d, t, 0.0)
                elif dw == 1:                                # right column(s) out of image
                    t = jnp.where(colf < (W - d), t, 0.0)
                taps.append(t)
        imc = jnp.concatenate(taps, axis=0).astype(ACT_DTYPE)   # (9*cin, L)
        return jnp.dot(w2d, imc, preferred_element_type=jnp.float32)

    # ---- cv1: 1x1 conv (BN scale folded into weight) + shift + SiLU -------
    y01 = jnp.dot(w1_ref[...], x_ref[0], preferred_element_type=jnp.float32)
    y01 = silu(y01 + b1_ref[...])                           # (2c, L) f32
    y1 = y01[c:, :]                                         # (c, L)

    # ---- m0.cv1: 3x3 conv + BN + SiLU --------------------------------------
    a = silu(conv3x3(padded(y1), wm_ref[...], 1) + bm_ref[...])   # (c, L) f32

    # ---- SAConv2d pre-context (mean over all-valid compact columns) --------
    mean_a = jnp.broadcast_to(jnp.sum(a, axis=1, keepdims=True) * inv_L, (c, L))
    xs = a + jnp.dot(prew_ref[...], mean_a,
                     preferred_element_type=jnp.float32) + preb_ref[...]

    # ---- switch: 1x1 conv commuted ahead of the 5x5 reflect avg pool -------
    s0 = jnp.sum(xs * sww_ref[...], axis=0, keepdims=True)       # (1, L) f32
    sw = jnp.dot(s0, poolm_ref[...],
                 preferred_element_type=jnp.float32) + swb_ref[...]   # (1, L)

    # ---- short (d=1) / long (d=3) AWS-conv branches + single-mul blend -----
    xsp = padded(xs)                                          # shared padded input
    out_s = conv3x3(xsp, ws_ref[...], 1)                      # (c, L) f32
    out_l = conv3x3(xsp, wl_ref[...], 3)                      # (c, L) f32
    out = out_l + sw * (out_s - out_l)

    # ---- post-context -------------------------------------------------------
    mean_o = jnp.broadcast_to(jnp.sum(out, axis=1, keepdims=True) * inv_L, (c, L))
    y2 = out + jnp.dot(postw_ref[...], mean_o,
                       preferred_element_type=jnp.float32) + postb_ref[...]

    # ---- cv2 on the virtual concat [y0, y1, y2] (single matmul) ------------
    z = jnp.concatenate([y01, y2], axis=0).astype(ACT_DTYPE)      # (3c, L)
    o = jnp.dot(w2_ref[...], z, preferred_element_type=jnp.float32) + b2_ref[...]
    o_ref[0] = silu(o).astype(o_ref.dtype)


# --------------------------------------------------------------------------
# Wrapper-side constant / weight preparation
# --------------------------------------------------------------------------
def _pool5_reflect_matrix(H, W):
    """Exact 5x5 mean-pool with reflect padding as an (L, L) right-multiply."""
    L = H * W

    def refl(i, n):
        if i < 0:
            return -i
        if i >= n:
            return 2 * n - 2 - i
        return i

    m = np.zeros((L, L), np.float32)
    for h in range(H):
        for w in range(W):
            p = h * W + w
            for dh in range(-2, 3):
                for dw in range(-2, 3):
                    q = refl(h + dh, H) * W + refl(w + dw, W)
                    m[q, p] += 1.0 / 25.0
    return m


def _im2col_weight(w_oihw):
    """(cout, cin, 3, 3) -> (cout, 9*cin), column order tap-major (k*cin + i)."""
    cout, cin = w_oihw.shape[0], w_oihw.shape[1]
    return jnp.transpose(w_oihw, (0, 2, 3, 1)).reshape(cout, 9 * cin)


def bn_fold(bn, eps=1e-5):
    scale = bn['gamma'] / jnp.sqrt(bn['var'] + eps)
    shift = bn['beta'] - bn['mean'] * scale
    return scale.astype(jnp.float32), shift.astype(jnp.float32)


def aws_weight(w, gamma, beta):
    """ConvAWS2d._get_weight: per-out-channel weight standardization (ddof=1)."""
    mean = jnp.mean(w, axis=(1, 2, 3), keepdims=True)
    wc = w - mean
    var = jnp.var(wc.reshape(w.shape[0], -1), axis=1, ddof=1)
    std = jnp.sqrt(var + 1e-5).reshape(-1, 1, 1, 1)
    return gamma * (wc / std) + beta


# --------------------------------------------------------------------------
# Module forward (all hot work in one pallas_call)
# --------------------------------------------------------------------------
def c2f_saconv2d_forward(x_nchw, params):
    """C2f_SAConv2d.forward (n=1, shortcut=False, use_deform=False). NCHW in/out."""
    N, C1, H, W = x_nchw.shape
    L = H * W
    xf = x_nchw.reshape(N, C1, L).astype(ACT_DTYPE)

    # Fold BN (inference) scale into conv weights in f32, keep the shift.
    s1, b1 = bn_fold(params['cv1']['bn'])
    w1 = (params['cv1']['w'].reshape(-1, C1) * s1[:, None]).astype(ACT_DTYPE)
    c = w1.shape[0] // 2
    c2 = params['cv2']['w'].shape[0]

    sm, bm = bn_fold(params['m0_cv1']['bn'])
    wm = _im2col_weight(params['m0_cv1']['w'] * sm[:, None, None, None]).astype(ACT_DTYPE)

    p_sa = params['m0_cv2']
    ws_oihw = aws_weight(p_sa['weight'], p_sa['weight_gamma'], p_sa['weight_beta'])
    ws = _im2col_weight(ws_oihw).astype(ACT_DTYPE)
    wl = _im2col_weight(ws_oihw + p_sa['weight_diff']).astype(ACT_DTYPE)

    s2, b2 = bn_fold(params['cv2']['bn'])
    w2 = (params['cv2']['w'].reshape(c2, 3 * c) * s2[:, None]).astype(ACT_DTYPE)

    # Tiny constants: column index (for the conv row-wrap masks) and the exact
    # 5x5 reflect-pool matrix.  Both have constant block index so they are
    # DMA'd once, not per grid step.
    colf = jnp.asarray((np.arange(L) % W).astype(np.float32)).reshape(1, L)
    poolm = jnp.asarray(_pool5_reflect_matrix(H, W))

    kern = functools.partial(_c2f_saconv_kernel, c=c, H=H, W=W)

    def wspec(shape):
        return pl.BlockSpec(shape, lambda b: (0, 0))

    out = pl.pallas_call(
        kern,
        out_shape=jax.ShapeDtypeStruct((N, c2, L), jnp.float32),
        grid=(N,),
        in_specs=[
            pl.BlockSpec((1, C1, L), lambda b: (b, 0, 0)),   # x
            wspec((1, L)),                                   # column index
            wspec((L, L)),                                   # pool matrix
            wspec((2 * c, C1)),                              # cv1 weight (scale folded)
            wspec((2 * c, 1)),                               # cv1 shift
            wspec((c, 9 * c)),                               # m0.cv1 im2col weight
            wspec((c, 1)),                                   # m0.cv1 shift
            wspec((c, c)),                                   # pre-context weight
            wspec((c, 1)),                                   # pre-context bias
            wspec((c, 1)),                                   # switch weight
            wspec((1, 1)),                                   # switch bias
            wspec((c, 9 * c)),                               # SAC short-branch weight
            wspec((c, 9 * c)),                               # SAC long-branch weight
            wspec((c, c)),                                   # post-context weight
            wspec((c, 1)),                                   # post-context bias
            wspec((c2, 3 * c)),                              # cv2 weight (scale folded)
            wspec((c2, 1)),                                  # cv2 shift
        ],
        out_specs=pl.BlockSpec((1, c2, L), lambda b: (b, 0, 0)),
        compiler_params=pltpu.CompilerParams(dimension_semantics=("parallel",)),
    )(xf, colf, poolm,
      w1, b1.reshape(-1, 1),
      wm, bm.reshape(-1, 1),
      p_sa['pre_w'].reshape(c, c).astype(jnp.float32),
      p_sa['pre_b'].reshape(c, 1).astype(jnp.float32),
      p_sa['switch_w'].reshape(c, 1).astype(jnp.float32),
      p_sa['switch_b'].reshape(1, 1).astype(jnp.float32),
      ws, wl,
      p_sa['post_w'].reshape(c, c).astype(jnp.float32),
      p_sa['post_b'].reshape(c, 1).astype(jnp.float32),
      w2, b2.reshape(-1, 1))
    return out.reshape(N, c2, H, W)


# --------------------------------------------------------------------------
# Deterministic parameter init (shapes from the PyTorch __init__)
# --------------------------------------------------------------------------
def init_params(key, c1=4, c2=8, e=0.5):
    c = int(c2 * e)
    keys = iter(jax.random.split(key, 40))

    def w(shape, s=0.1):
        return jax.random.normal(next(keys), shape, jnp.float32) * s

    def bn(ch):
        return dict(
            gamma=jax.random.uniform(next(keys), (ch,), jnp.float32, 0.5, 1.5),
            beta=jax.random.normal(next(keys), (ch,), jnp.float32) * 0.1,
            mean=jax.random.normal(next(keys), (ch,), jnp.float32) * 0.1,
            var=jax.random.uniform(next(keys), (ch,), jnp.float32, 0.5, 1.5),
        )

    return {
        'cv1': {'w': w((2 * c, c1, 1, 1)), 'bn': bn(2 * c)},
        'cv2': {'w': w((c2, 3 * c, 1, 1)), 'bn': bn(c2)},
        'm0_cv1': {'w': w((c, c, 3, 3)), 'bn': bn(c)},
        'm0_cv2': {
            'weight': w((c, c, 3, 3)),
            'weight_gamma': jax.random.uniform(next(keys), (c, 1, 1, 1), jnp.float32, 0.5, 1.5),
            'weight_beta': w((c, 1, 1, 1), 0.05),
            'weight_diff': w((c, c, 3, 3), 0.05),
            'switch_w': w((1, c, 1, 1)),
            'switch_b': jnp.ones((1,), jnp.float32),
            'pre_w': w((c, c, 1, 1), 0.05),
            'pre_b': w((c,), 0.05),
            'post_w': w((c, c, 1, 1), 0.05),
            'post_b': w((c,), 0.05),
        },
    }


# --------------------------------------------------------------------------
# Pure-JAX (lax.conv, f32) reference for a correctness check
# --------------------------------------------------------------------------
def _conv_ref(x, wgt, pad=0, dil=1, bias=None):
    out = jax.lax.conv_general_dilated(
        x, wgt, window_strides=(1, 1),
        padding=((pad, pad), (pad, pad)),
        rhs_dilation=(dil, dil),
        dimension_numbers=('NCHW', 'OIHW', 'NCHW'),
        precision=jax.lax.Precision.HIGHEST)
    if bias is not None:
        out = out + bias[None, :, None, None]
    return out


def _ref_forward(x, params):
    def cba(x, wgt, bn, pad, dil=1):
        s, b = bn_fold(bn)
        y = _conv_ref(x, wgt, pad, dil) * s[None, :, None, None] + b[None, :, None, None]
        return y * jax.nn.sigmoid(y)

    def saconv(x, p):
        avg = _conv_ref(jnp.mean(x, axis=(2, 3), keepdims=True), p['pre_w'], bias=p['pre_b'])
        x = x + avg
        xp = jnp.pad(x, ((0, 0), (0, 0), (2, 2), (2, 2)), mode='reflect')
        avg_x = jax.lax.reduce_window(xp, 0.0, jax.lax.add, (1, 1, 5, 5),
                                      (1, 1, 1, 1), 'VALID') / 25.0
        sw = _conv_ref(avg_x, p['switch_w'], bias=p['switch_b'])
        ws = aws_weight(p['weight'], p['weight_gamma'], p['weight_beta'])
        out = sw * _conv_ref(x, ws, 1, 1) + (1 - sw) * _conv_ref(x, ws + p['weight_diff'], 3, 3)
        avg = _conv_ref(jnp.mean(out, axis=(2, 3), keepdims=True), p['post_w'], bias=p['post_b'])
        return out + avg

    t = cba(x, params['cv1']['w'], params['cv1']['bn'], 0)
    c = t.shape[1] // 2
    y0, y1 = t[:, :c], t[:, c:]
    a = cba(y1, params['m0_cv1']['w'], params['m0_cv1']['bn'], 1)
    y2 = saconv(a, params['m0_cv2'])
    return cba(jnp.concatenate([y0, y1, y2], axis=1),
               params['cv2']['w'], params['cv2']['bn'], 0)


# --------------------------------------------------------------------------
if __name__ == "__main__":
    key = jax.random.PRNGKey(0)
    kx, kp = jax.random.split(key)
    N, C1, H, W = 2, 4, 16, 16
    C2 = 8
    x = jax.random.normal(kx, (N, C1, H, W), jnp.float32)
    params = init_params(kp, c1=C1, c2=C2, e=0.5)

    fwd = jax.jit(c2f_saconv2d_forward)
    out = jax.block_until_ready(fwd(x, params))
    assert out.shape == (N, C2, H, W), out.shape

    ref = jax.block_until_ready(_ref_forward(x, params))
    # bf16 MXU operands with f32 accumulation -> relaxed tolerance vs f32 reference.
    np.testing.assert_allclose(np.asarray(out), np.asarray(ref), rtol=5e-2, atol=5e-2)

    print("KERNEL_OK")
</pallas_src>

<mosaic_0001>
module attributes {stable_mosaic.version = 11 : i64} {
  func.func @_c2f_saconv_kernel(%arg0: i32, %arg1: memref<1x4x256xbf16, #tpu.memory_space<vmem>>, %arg2: memref<1x256xf32, #tpu.memory_space<vmem>>, %arg3: memref<256x256xf32, #tpu.memory_space<vmem>>, %arg4: memref<8x4xbf16, #tpu.memory_space<vmem>>, %arg5: memref<8x1xf32, #tpu.memory_space<vmem>>, %arg6: memref<4x36xbf16, #tpu.memory_space<vmem>>, %arg7: memref<4x1xf32, #tpu.memory_space<vmem>>, %arg8: memref<4x4xf32, #tpu.memory_space<vmem>>, %arg9: memref<4x1xf32, #tpu.memory_space<vmem>>, %arg10: memref<4x1xf32, #tpu.memory_space<vmem>>, %arg11: memref<1x1xf32, #tpu.memory_space<vmem>>, %arg12: memref<4x36xbf16, #tpu.memory_space<vmem>>, %arg13: memref<4x36xbf16, #tpu.memory_space<vmem>>, %arg14: memref<4x4xf32, #tpu.memory_space<vmem>>, %arg15: memref<4x1xf32, #tpu.memory_space<vmem>>, %arg16: memref<8x12xbf16, #tpu.memory_space<vmem>>, %arg17: memref<8x1xf32, #tpu.memory_space<vmem>>, %arg18: memref<1x8x256xf32, #tpu.memory_space<vmem>>) attributes {dimension_semantics = [#tpu.dimension_semantics<parallel>], iteration_bounds = array<i64: 2>, scalar_prefetch = 0 : i64, scratch_operands = 0 : i64, tpu.core_type = #tpu.core_type<tc>, window_params = [{transform_indices = @transform_0, window_bounds = array<i64: 1, 4, 256>}, {pipeline_mode = #tpu.pipeline_mode<synchronous>, transform_indices = @transform_1, window_bounds = array<i64: 1, 256>}, {pipeline_mode = #tpu.pipeline_mode<synchronous>, transform_indices = @transform_2, window_bounds = array<i64: 256, 256>}, {pipeline_mode = #tpu.pipeline_mode<synchronous>, transform_indices = @transform_3, window_bounds = array<i64: 8, 4>}, {pipeline_mode = #tpu.pipeline_mode<synchronous>, transform_indices = @transform_4, window_bounds = array<i64: 8, 1>}, {pipeline_mode = #tpu.pipeline_mode<synchronous>, transform_indices = @transform_5, window_bounds = array<i64: 4, 36>}, {pipeline_mode = #tpu.pipeline_mode<synchronous>, transform_indices = @transform_6, window_bounds = array<i64: 4, 1>}, {pipeline_mode = #tpu.pipeline_mode<synchronous>, transform_indices = @transform_7, window_bounds = array<i64: 4, 4>}, {pipeline_mode = #tpu.pipeline_mode<synchronous>, transform_indices = @transform_8, window_bounds = array<i64: 4, 1>}, {pipeline_mode = #tpu.pipeline_mode<synchronous>, transform_indices = @transform_9, window_bounds = array<i64: 4, 1>}, {pipeline_mode = #tpu.pipeline_mode<synchronous>, transform_indices = @transform_10, window_bounds = array<i64: 1, 1>}, {pipeline_mode = #tpu.pipeline_mode<synchronous>, transform_indices = @transform_11, window_bounds = array<i64: 4, 36>}, {pipeline_mode = #tpu.pipeline_mode<synchronous>, transform_indices = @transform_12, window_bounds = array<i64: 4, 36>}, {pipeline_mode = #tpu.pipeline_mode<synchronous>, transform_indices = @transform_13, window_bounds = array<i64: 4, 4>}, {pipeline_mode = #tpu.pipeline_mode<synchronous>, transform_indices = @transform_14, window_bounds = array<i64: 4, 1>}, {pipeline_mode = #tpu.pipeline_mode<synchronous>, transform_indices = @transform_15, window_bounds = array<i64: 8, 12>}, {pipeline_mode = #tpu.pipeline_mode<synchronous>, transform_indices = @transform_16, window_bounds = array<i64: 8, 1>}, {transform_indices = @transform_17, window_bounds = array<i64: 1, 8, 256>}]} {
    %c0 = arith.constant 0 : index
    %c0_0 = arith.constant 0 : index
    %0 = vector.load %arg2[%c0, %c0_0] : memref<1x256xf32, #tpu.memory_space<vmem>>, vector<1x256xf32>
    %c0_1 = arith.constant 0 : index
    %c0_2 = arith.constant 0 : index
    %1 = vector.load %arg4[%c0_1, %c0_2] : memref<8x4xbf16, #tpu.memory_space<vmem>>, vector<8x4xbf16>
    %c0_3 = arith.constant 0 : index
    %c0_4 = arith.constant 0 : index
    %c0_5 = arith.constant 0 : index
    %2 = vector.load %arg1[%c0_3, %c0_4, %c0_5] : memref<1x4x256xbf16, #tpu.memory_space<vmem>>, vector<1x4x256xbf16>
    %3 = vector.shape_cast %2 : vector<1x4x256xbf16> to vector<4x256xbf16>
    %cst = arith.constant dense<0.000000e+00> : vector<8x256xf32>
    %4 = tpu.matmul %1, %3, %cst {dimension_numbers = #tpu.dot_dimension_numbers<[1], [0], [0], [1], [0, 0, 1, 1], [], []>} : vector<8x4xbf16>, vector<4x256xbf16>, vector<8x256xf32> -> vector<8x256xf32>
    %c0_6 = arith.constant 0 : index
    %c0_7 = arith.constant 0 : index
    %5 = vector.load %arg5[%c0_6, %c0_7] : memref<8x1xf32, #tpu.memory_space<vmem>>, vector<8x1xf32>
    %6 = vector.broadcast %5 : vector<8x1xf32> to vector<8x256xf32>
    %7 = arith.addf %4, %6 : vector<8x256xf32>
    %8 = arith.negf %7 : vector<8x256xf32>
    %9 = math.exp %8 : vector<8x256xf32>
    %cst_8 = arith.constant 1.000000e+00 : f32
    %10 = vector.broadcast %cst_8 : f32 to vector<8x256xf32>
    %11 = arith.addf %10, %9 : vector<8x256xf32>
    %12 = arith.divf %10, %11 : vector<8x256xf32>
    %13 = arith.mulf %7, %12 : vector<8x256xf32>
    %14 = vector.extract_strided_slice %13 {offsets = [4, 0], sizes = [4, 256], strides = [1, 1]} : vector<8x256xf32> to vector<4x256xf32>
    %cst_9 = arith.constant 0.000000e+00 : f32
    %15 = vector.broadcast %cst_9 : f32 to vector<4x128xf32>
    %16 = tpu.concatenate %15, %14, %15 in 1 : vector<4x128xf32>, vector<4x256xf32>, vector<4x128xf32> -> vector<4x512xf32>
    %c0_10 = arith.constant 0 : index
    %c0_11 = arith.constant 0 : index
    %17 = vector.load %arg6[%c0_10, %c0_11] : memref<4x36xbf16, #tpu.memory_space<vmem>>, vector<4x36xbf16>
    %18 = vector.extract_strided_slice %16 {offsets = [0, 111], sizes = [4, 256], strides = [1, 1]} : vector<4x512xf32> to vector<4x256xf32>
    %cst_12 = arith.constant 1.000000e+00 : f32
    %19 = vector.broadcast %cst_12 : f32 to vector<1x256xf32>
    %20 = arith.cmpf oge, %0, %19 : vector<1x256xf32>
    %cst_13 = arith.constant 0.000000e+00 : f32
    %21 = vector.shape_cast %20 : vector<1x256xi1> to vector<1x256xi1>
    %22 = vector.broadcast %21 : vector<1x256xi1> to vector<4x256xi1>
    %23 = vector.broadcast %cst_13 : f32 to vector<4x256xf32>
    %24 = arith.select %22, %18, %23 : vector<4x256xi1>, vector<4x256xf32>
    %25 = vector.extract_strided_slice %16 {offsets = [0, 112], sizes = [4, 256], strides = [1, 1]} : vector<4x512xf32> to vector<4x256xf32>
    %26 = vector.extract_strided_slice %16 {offsets = [0, 113], sizes = [4, 256], strides = [1, 1]} : vector<4x512xf32> to vector<4x256xf32>
    %cst_14 = arith.constant 1.500000e+01 : f32
    %27 = vector.broadcast %cst_14 : f32 to vector<1x256xf32>
    %28 = arith.cmpf olt, %0, %27 : vector<1x256xf32>
    %cst_15 = arith.constant 0.000000e+00 : f32
    %29 = vector.shape_cast %28 : vector<1x256xi1> to vector<1x256xi1>
    %30 = vector.broadcast %29 : vector<1x256xi1> to vector<4x256xi1>
    %31 = vector.broadcast %cst_15 : f32 to vector<4x256xf32>
    %32 = arith.select %30, %26, %31 : vector<4x256xi1>, vector<4x256xf32>
    %33 = vector.extract_strided_slice %16 {offsets = [0, 127], sizes = [4, 256], strides = [1, 1]} : vector<4x512xf32> to vector<4x256xf32>
    %cst_16 = arith.constant 1.000000e+00 : f32
    %34 = vector.broadcast %cst_16 : f32 to vector<1x256xf32>
    %35 = arith.cmpf oge, %0, %34 : vector<1x256xf32>
    %cst_17 = arith.constant 0.000000e+00 : f32
    %36 = vector.shape_cast %35 : vector<1x256xi1> to vector<1x256xi1>
    %37 = vector.broadcast %36 : vector<1x256xi1> to vector<4x256xi1>
    %38 = vector.broadcast %cst_17 : f32 to vector<4x256xf32>
    %39 = arith.select %37, %33, %38 : vector<4x256xi1>, vector<4x256xf32>
    %40 = vector.extract_strided_slice %16 {offsets = [0, 128], sizes = [4, 256], strides = [1, 1]} : vector<4x512xf32> to vector<4x256xf32>
    %41 = vector.extract_strided_slice %16 {offsets = [0, 129], sizes = [4, 256], strides = [1, 1]} : vector<4x512xf32> to vector<4x256xf32>
    %cst_18 = arith.constant 1.500000e+01 : f32
    %42 = vector.broadcast %cst_18 : f32 to vector<1x256xf32>
    %43 = arith.cmpf olt, %0, %42 : vector<1x256xf32>
    %cst_19 = arith.constant 0.000000e+00 : f32
    %44 = vector.shape_cast %43 : vector<1x256xi1> to vector<1x256xi1>
    %45 = vector.broadcast %44 : vector<1x256xi1> to vector<4x256xi1>
    %46 = vector.broadcast %cst_19 : f32 to vector<4x256xf32>
    %47 = arith.select %45, %41, %46 : vector<4x256xi1>, vector<4x256xf32>
    %48 = vector.extract_strided_slice %16 {offsets = [0, 143], sizes = [4, 256], strides = [1, 1]} : vector<4x512xf32> to vector<4x256xf32>
    %cst_20 = arith.constant 1.000000e+00 : f32
    %49 = vector.broadcast %cst_20 : f32 to vector<1x256xf32>
    %50 = arith.cmpf oge, %0, %49 : vector<1x256xf32>
    %cst_21 = arith.constant 0.000000e+00 : f32
    %51 = vector.shape_cast %50 : vector<1x256xi1> to vector<1x256xi1>
    %52 = vector.broadcast %51 : vector<1x256xi1> to vector<4x256xi1>
    %53 = vector.broadcast %cst_21 : f32 to vector<4x256xf32>
    %54 = arith.select %52, %48, %53 : vector<4x256xi1>, vector<4x256xf32>
    %55 = vector.extract_strided_slice %16 {offsets = [0, 144], sizes = [4, 256], strides = [1, 1]} : vector<4x512xf32> to vector<4x256xf32>
    %56 = vector.extract_strided_slice %16 {offsets = [0, 145], sizes = [4, 256], strides = [1, 1]} : vector<4x512xf32> to vector<4x256xf32>
    %cst_22 = arith.constant 1.500000e+01 : f32
    %57 = vector.broadcast %cst_22 : f32 to vector<1x256xf32>
    %58 = arith.cmpf olt, %0, %57 : vector<1x256xf32>
    %cst_23 = arith.constant 0.000000e+00 : f32
    %59 = vector.shape_cast %58 : vector<1x256xi1> to vector<1x256xi1>
    %60 = vector.broadcast %59 : vector<1x256xi1> to vector<4x256xi1>
    %61 = vector.broadcast %cst_23 : f32 to vector<4x256xf32>
    %62 = arith.select %60, %56, %61 : vector<4x256xi1>, vector<4x256xf32>
    %63 = tpu.concatenate %24, %25, %32, %39, %40, %47, %54, %55, %62 in 0 : vector<4x256xf32>, vector<4x256xf32>, vector<4x256xf32>, vector<4x256xf32>, vector<4x256xf32>, vector<4x256xf32>, vector<4x256xf32>, vector<4x256xf32>, vector<4x256xf32> -> vector<36x256xf32>
    %64 = arith.truncf %63 : vector<36x256xf32> to vector<36x256xbf16>
    %cst_24 = arith.constant dense<0.000000e+00> : vector<4x256xf32>
    %65 = tpu.matmul %17, %64, %cst_24 {dimension_numbers = #tpu.dot_dimension_numbers<[1], [0], [0], [1], [0, 0, 1, 1], [], []>} : vector<4x36xbf16>, vector<36x256xbf16>, vector<4x256xf32> -> vector<4x256xf32>
    %c0_25 = arith.constant 0 : index
    %c0_26 = arith.constant 0 : index
    %66 = vector.load %arg7[%c0_25, %c0_26] : memref<4x1xf32, #tpu.memory_space<vmem>>, vector<4x1xf32>
    %67 = vector.broadcast %66 : vector<4x1xf32> to vector<4x256xf32>
    %68 = arith.addf %65, %67 : vector<4x256xf32>
    %69 = arith.negf %68 : vector<4x256xf32>
    %70 = math.exp %69 : vector<4x256xf32>
    %cst_27 = arith.constant 1.000000e+00 : f32
    %71 = vector.broadcast %cst_27 : f32 to vector<4x256xf32>
    %72 = arith.addf %71, %70 : vector<4x256xf32>
    %73 = arith.divf %71, %72 : vector<4x256xf32>
    %74 = arith.mulf %68, %73 : vector<4x256xf32>
    %cst_28 = arith.constant dense<0.000000e+00> : vector<4xf32>
    %75 = vector.multi_reduction <add>, %74, %cst_28 [1] : vector<4x256xf32> to vector<4xf32>
    %76 = vector.shape_cast %75 : vector<4xf32> to vector<4x1xf32>
    %cst_29 = arith.constant 3.906250e-03 : f32
    %77 = vector.broadcast %cst_29 : f32 to vector<4x1xf32>
    %78 = arith.mulf %76, %77 : vector<4x1xf32>
    %79 = vector.shape_cast %78 : vector<4x1xf32> to vector<4x1xf32>
    %80 = vector.broadcast %79 : vector<4x1xf32> to vector<4x256xf32>
    %c0_30 = arith.constant 0 : index
    %c0_31 = arith.constant 0 : index
    %81 = vector.load %arg8[%c0_30, %c0_31] : memref<4x4xf32, #tpu.memory_space<vmem>>, vector<4x4xf32>
    %cst_32 = arith.constant dense<0.000000e+00> : vector<4x256xf32>
    %82 = tpu.matmul %81, %80, %cst_32 {dimension_numbers = #tpu.dot_dimension_numbers<[1], [0], [0], [1], [0, 0, 1, 1], [], []>} : vector<4x4xf32>, vector<4x256xf32>, vector<4x256xf32> -> vector<4x256xf32>
    %83 = arith.addf %74, %82 : vector<4x256xf32>
    %c0_33 = arith.constant 0 : index
    %c0_34 = arith.constant 0 : index
    %84 = vector.load %arg9[%c0_33, %c0_34] : memref<4x1xf32, #tpu.memory_space<vmem>>, vector<4x1xf32>
    %85 = vector.broadcast %84 : vector<4x1xf32> to vector<4x256xf32>
    %86 = arith.addf %83, %85 : vector<4x256xf32>
    %c0_35 = arith.constant 0 : index
    %c0_36 = arith.constant 0 : index
    %87 = vector.load %arg10[%c0_35, %c0_36] : memref<4x1xf32, #tpu.memory_space<vmem>>, vector<4x1xf32>
    %88 = vector.broadcast %87 : vector<4x1xf32> to vector<4x256xf32>
    %89 = arith.mulf %86, %88 : vector<4x256xf32>
    %cst_37 = arith.constant dense<0.000000e+00> : vector<256xf32>
    %90 = vector.multi_reduction <add>, %89, %cst_37 [0] : vector<4x256xf32> to vector<256xf32>
    %91 = vector.shape_cast %90 : vector<256xf32> to vector<1x256xf32>
    %c0_38 = arith.constant 0 : index
    %c0_39 = arith.constant 0 : index
    %92 = vector.load %arg3[%c0_38, %c0_39] : memref<256x256xf32, #tpu.memory_space<vmem>>, vector<256x256xf32>
    %cst_40 = arith.constant dense<0.000000e+00> : vector<1x256xf32>
    %93 = tpu.matmul %91, %92, %cst_40 {dimension_numbers = #tpu.dot_dimension_numbers<[1], [0], [0], [1], [0, 0, 1, 1], [], []>} : vector<1x256xf32>, vector<256x256xf32>, vector<1x256xf32> -> vector<1x256xf32>
    %c0_41 = arith.constant 0 : index
    %c0_42 = arith.constant 0 : index
    %94 = vector.load %arg11[%c0_41, %c0_42] : memref<1x1xf32, #tpu.memory_space<vmem>>, vector<1x1xf32>
    %95 = vector.broadcast %94 : vector<1x1xf32> to vector<1x256xf32>
    %96 = arith.addf %93, %95 : vector<1x256xf32>
    %cst_43 = arith.constant 0.000000e+00 : f32
    %97 = vector.broadcast %cst_43 : f32 to vector<4x128xf32>
    %98 = tpu.concatenate %97, %86, %97 in 1 : vector<4x128xf32>, vector<4x256xf32>, vector<4x128xf32> -> vector<4x512xf32>
    %c0_44 = arith.constant 0 : index
    %c0_45 = arith.constant 0 : index
    %99 = vector.load %arg12[%c0_44, %c0_45] : memref<4x36xbf16, #tpu.memory_space<vmem>>, vector<4x36xbf16>
    %100 = vector.extract_strided_slice %98 {offsets = [0, 111], sizes = [4, 256], strides = [1, 1]} : vector<4x512xf32> to vector<4x256xf32>
    %cst_46 = arith.constant 1.000000e+00 : f32
    %101 = vector.broadcast %cst_46 : f32 to vector<1x256xf32>
    %102 = arith.cmpf oge, %0, %101 : vector<1x256xf32>
    %cst_47 = arith.constant 0.000000e+00 : f32
    %103 = vector.shape_cast %102 : vector<1x256xi1> to vector<1x256xi1>
    %104 = vector.broadcast %103 : vector<1x256xi1> to vector<4x256xi1>
    %105 = vector.broadcast %cst_47 : f32 to vector<4x256xf32>
    %106 = arith.select %104, %100, %105 : vector<4x256xi1>, vector<4x256xf32>
    %107 = vector.extract_strided_slice %98 {offsets = [0, 112], sizes = [4, 256], strides = [1, 1]} : vector<4x512xf32> to vector<4x256xf32>
    %108 = vector.extract_strided_slice %98 {offsets = [0, 113], sizes = [4, 256], strides = [1, 1]} : vector<4x512xf32> to vector<4x256xf32>
    %cst_48 = arith.constant 1.500000e+01 : f32
    %109 = vector.broadcast %cst_48 : f32 to vector<1x256xf32>
    %110 = arith.cmpf olt, %0, %109 : vector<1x256xf32>
    %cst_49 = arith.constant 0.000000e+00 : f32
    %111 = vector.shape_cast %110 : vector<1x256xi1> to vector<1x256xi1>
    %112 = vector.broadcast %111 : vector<1x256xi1> to vector<4x256xi1>
    %113 = vector.broadcast %cst_49 : f32 to vector<4x256xf32>
    %114 = arith.select %112, %108, %113 : vector<4x256xi1>, vector<4x256xf32>
    %115 = vector.extract_strided_slice %98 {offsets = [0, 127], sizes = [4, 256], strides = [1, 1]} : vector<4x512xf32> to vector<4x256xf32>
    %cst_50 = arith.constant 1.000000e+00 : f32
    %116 = vector.broadcast %cst_50 : f32 to vector<1x256xf32>
    %117 = arith.cmpf oge, %0, %116 : vector<1x256xf32>
    %cst_51 = arith.constant 0.000000e+00 : f32
    %118 = vector.shape_cast %117 : vector<1x256xi1> to vector<1x256xi1>
    %119 = vector.broadcast %118 : vector<1x256xi1> to vector<4x256xi1>
    %120 = vector.broadcast %cst_51 : f32 to vector<4x256xf32>
    %121 = arith.select %119, %115, %120 : vector<4x256xi1>, vector<4x256xf32>
    %122 = vector.extract_strided_slice %98 {offsets = [0, 128], sizes = [4, 256], strides = [1, 1]} : vector<4x512xf32> to vector<4x256xf32>
    %123 = vector.extract_strided_slice %98 {offsets = [0, 129], sizes = [4, 256], strides = [1, 1]} : vector<4x512xf32> to vector<4x256xf32>
    %cst_52 = arith.constant 1.500000e+01 : f32
    %124 = vector.broadcast %cst_52 : f32 to vector<1x256xf32>
    %125 = arith.cmpf olt, %0, %124 : vector<1x256xf32>
    %cst_53 = arith.constant 0.000000e+00 : f32
    %126 = vector.shape_cast %125 : vector<1x256xi1> to vector<1x256xi1>
    %127 = vector.broadcast %126 : vector<1x256xi1> to vector<4x256xi1>
    %128 = vector.broadcast %cst_53 : f32 to vector<4x256xf32>
    %129 = arith.select %127, %123, %128 : vector<4x256xi1>, vector<4x256xf32>
    %130 = vector.extract_strided_slice %98 {offsets = [0, 143], sizes = [4, 256], strides = [1, 1]} : vector<4x512xf32> to vector<4x256xf32>
    %cst_54 = arith.constant 1.000000e+00 : f32
    %131 = vector.broadcast %cst_54 : f32 to vector<1x256xf32>
    %132 = arith.cmpf oge, %0, %131 : vector<1x256xf32>
    %cst_55 = arith.constant 0.000000e+00 : f32
    %133 = vector.shape_cast %132 : vector<1x256xi1> to vector<1x256xi1>
    %134 = vector.broadcast %133 : vector<1x256xi1> to vector<4x256xi1>
    %135 = vector.broadcast %cst_55 : f32 to vector<4x256xf32>
    %136 = arith.select %134, %130, %135 : vector<4x256xi1>, vector<4x256xf32>
    %137 = vector.extract_strided_slice %98 {offsets = [0, 144], sizes = [4, 256], strides = [1, 1]} : vector<4x512xf32> to vector<4x256xf32>
    %138 = vector.extract_strided_slice %98 {offsets = [0, 145], sizes = [4, 256], strides = [1, 1]} : vector<4x512xf32> to vector<4x256xf32>
    %cst_56 = arith.constant 1.500000e+01 : f32
    %139 = vector.broadcast %cst_56 : f32 to vector<1x256xf32>
    %140 = arith.cmpf olt, %0, %139 : vector<1x256xf32>
    %cst_57 = arith.constant 0.000000e+00 : f32
    %141 = vector.shape_cast %140 : vector<1x256xi1> to vector<1x256xi1>
    %142 = vector.broadcast %141 : vector<1x256xi1> to vector<4x256xi1>
    %143 = vector.broadcast %cst_57 : f32 to vector<4x256xf32>
    %144 = arith.select %142, %138, %143 : vector<4x256xi1>, vector<4x256xf32>
    %145 = tpu.concatenate %106, %107, %114, %121, %122, %129, %136, %137, %144 in 0 : vector<4x256xf32>, vector<4x256xf32>, vector<4x256xf32>, vector<4x256xf32>, vector<4x256xf32>, vector<4x256xf32>, vector<4x256xf32>, vector<4x256xf32>, vector<4x256xf32> -> vector<36x256xf32>
    %146 = arith.truncf %145 : vector<36x256xf32> to vector<36x256xbf16>
    %cst_58 = arith.constant dense<0.000000e+00> : vector<4x256xf32>
    %147 = tpu.matmul %99, %146, %cst_58 {dimension_numbers = #tpu.dot_dimension_numbers<[1], [0], [0], [1], [0, 0, 1, 1], [], []>} : vector<4x36xbf16>, vector<36x256xbf16>, vector<4x256xf32> -> vector<4x256xf32>
    %c0_59 = arith.constant 0 : index
    %c0_60 = arith.constant 0 : index
    %148 = vector.load %arg13[%c0_59, %c0_60] : memref<4x36xbf16, #tpu.memory_space<vmem>>, vector<4x36xbf16>
    %149 = vector.extract_strided_slice %98 {offsets = [0, 77], sizes = [4, 256], strides = [1, 1]} : vector<4x512xf32> to vector<4x256xf32>
    %cst_61 = arith.constant 3.000000e+00 : f32
    %150 = vector.broadcast %cst_61 : f32 to vector<1x256xf32>
    %151 = arith.cmpf oge, %0, %150 : vector<1x256xf32>
    %cst_62 = arith.constant 0.000000e+00 : f32
    %152 = vector.shape_cast %151 : vector<1x256xi1> to vector<1x256xi1>
    %153 = vector.broadcast %152 : vector<1x256xi1> to vector<4x256xi1>
    %154 = vector.broadcast %cst_62 : f32 to vector<4x256xf32>
    %155 = arith.select %153, %149, %154 : vector<4x256xi1>, vector<4x256xf32>
    %156 = vector.extract_strided_slice %98 {offsets = [0, 80], sizes = [4, 256], strides = [1, 1]} : vector<4x512xf32> to vector<4x256xf32>
    %157 = vector.extract_strided_slice %98 {offsets = [0, 83], sizes = [4, 256], strides = [1, 1]} : vector<4x512xf32> to vector<4x256xf32>
    %cst_63 = arith.constant 1.300000e+01 : f32
    %158 = vector.broadcast %cst_63 : f32 to vector<1x256xf32>
    %159 = arith.cmpf olt, %0, %158 : vector<1x256xf32>
    %cst_64 = arith.constant 0.000000e+00 : f32
    %160 = vector.shape_cast %159 : vector<1x256xi1> to vector<1x256xi1>
    %161 = vector.broadcast %160 : vector<1x256xi1> to vector<4x256xi1>
    %162 = vector.broadcast %cst_64 : f32 to vector<4x256xf32>
    %163 = arith.select %161, %157, %162 : vector<4x256xi1>, vector<4x256xf32>
    %164 = vector.extract_strided_slice %98 {offsets = [0, 125], sizes = [4, 256], strides = [1, 1]} : vector<4x512xf32> to vector<4x256xf32>
    %cst_65 = arith.constant 3.000000e+00 : f32
    %165 = vector.broadcast %cst_65 : f32 to vector<1x256xf32>
    %166 = arith.cmpf oge, %0, %165 : vector<1x256xf32>
    %cst_66 = arith.constant 0.000000e+00 : f32
    %167 = vector.shape_cast %166 : vector<1x256xi1> to vector<1x256xi1>
    %168 = vector.broadcast %167 : vector<1x256xi1> to vector<4x256xi1>
    %169 = vector.broadcast %cst_66 : f32 to vector<4x256xf32>
    %170 = arith.select %168, %164, %169 : vector<4x256xi1>, vector<4x256xf32>
    %171 = vector.extract_strided_slice %98 {offsets = [0, 128], sizes = [4, 256], strides = [1, 1]} : vector<4x512xf32> to vector<4x256xf32>
    %172 = vector.extract_strided_slice %98 {offsets = [0, 131], sizes = [4, 256], strides = [1, 1]} : vector<4x512xf32> to vector<4x256xf32>
    %cst_67 = arith.constant 1.300000e+01 : f32
    %173 = vector.broadcast %cst_67 : f32 to vector<1x256xf32>
    %174 = arith.cmpf olt, %0, %173 : vector<1x256xf32>
    %cst_68 = arith.constant 0.000000e+00 : f32
    %175 = vector.shape_cast %174 : vector<1x256xi1> to vector<1x256xi1>
    %176 = vector.broadcast %175 : vector<1x256xi1> to vector<4x256xi1>
    %177 = vector.broadcast %cst_68 : f32 to vector<4x256xf32>
    %178 = arith.select %176, %172, %177 : vector<4x256xi1>, vector<4x256xf32>
    %179 = vector.extract_strided_slice %98 {offsets = [0, 173], sizes = [4, 256], strides = [1, 1]} : vector<4x512xf32> to vector<4x256xf32>
    %cst_69 = arith.constant 3.000000e+00 : f32
    %180 = vector.broadcast %cst_69 : f32 to vector<1x256xf32>
    %181 = arith.cmpf oge, %0, %180 : vector<1x256xf32>
    %cst_70 = arith.constant 0.000000e+00 : f32
    %182 = vector.shape_cast %181 : vector<1x256xi1> to vector<1x256xi1>
    %183 = vector.broadcast %182 : vector<1x256xi1> to vector<4x256xi1>
    %184 = vector.broadcast %cst_70 : f32 to vector<4x256xf32>
    %185 = arith.select %183, %179, %184 : vector<4x256xi1>, vector<4x256xf32>
    %186 = vector.extract_strided_slice %98 {offsets = [0, 176], sizes = [4, 256], strides = [1, 1]} : vector<4x512xf32> to vector<4x256xf32>
    %187 = vector.extract_strided_slice %98 {offsets = [0, 179], sizes = [4, 256], strides = [1, 1]} : vector<4x512xf32> to vector<4x256xf32>
    %cst_71 = arith.constant 1.300000e+01 : f32
    %188 = vector.broadcast %cst_71 : f32 to vector<1x256xf32>
    %189 = arith.cmpf olt, %0, %188 : vector<1x256xf32>
    %cst_72 = arith.constant 0.000000e+00 : f32
    %190 = vector.shape_cast %189 : vector<1x256xi1> to vector<1x256xi1>
    %191 = vector.broadcast %190 : vector<1x256xi1> to vector<4x256xi1>
    %192 = vector.broadcast %cst_72 : f32 to vector<4x256xf32>
    %193 = arith.select %191, %187, %192 : vector<4x256xi1>, vector<4x256xf32>
    %194 = tpu.concatenate %155, %156, %163, %170, %171, %178, %185, %186, %193 in 0 : vector<4x256xf32>, vector<4x256xf32>, vector<4x256xf32>, vector<4x256xf32>, vector<4x256xf32>, vector<4x256xf32>, vector<4x256xf32>, vector<4x256xf32>, vector<4x256xf32> -> vector<36x256xf32>
    %195 = arith.truncf %194 : vector<36x256xf32> to vector<36x256xbf16>
    %cst_73 = arith.constant dense<0.000000e+00> : vector<4x256xf32>
    %196 = tpu.matmul %148, %195, %cst_73 {dimension_numbers = #tpu.dot_dimension_numbers<[1], [0], [0], [1], [0, 0, 1, 1], [], []>} : vector<4x36xbf16>, vector<36x256xbf16>, vector<4x256xf32> -> vector<4x256xf32>
    %197 = arith.subf %147, %196 : vector<4x256xf32>
    %198 = vector.broadcast %96 : vector<1x256xf32> to vector<4x256xf32>
    %199 = arith.mulf %198, %197 : vector<4x256xf32>
    %200 = arith.addf %196, %199 : vector<4x256xf32>
    %cst_74 = arith.constant dense<0.000000e+00> : vector<4xf32>
    %201 = vector.multi_reduction <add>, %200, %cst_74 [1] : vector<4x256xf32> to vector<4xf32>
    %202 = vector.shape_cast %201 : vector<4xf32> to vector<4x1xf32>
    %cst_75 = arith.constant 3.906250e-03 : f32
    %203 = vector.broadcast %cst_75 : f32 to vector<4x1xf32>
    %204 = arith.mulf %202, %203 : vector<4x1xf32>
    %205 = vector.shape_cast %204 : vector<4x1xf32> to vector<4x1xf32>
    %206 = vector.broadcast %205 : vector<4x1xf32> to vector<4x256xf32>
    %c0_76 = arith.constant 0 : index
    %c0_77 = arith.constant 0 : index
    %207 = vector.load %arg14[%c0_76, %c0_77] : memref<4x4xf32, #tpu.memory_space<vmem>>, vector<4x4xf32>
    %cst_78 = arith.constant dense<0.000000e+00> : vector<4x256xf32>
    %208 = tpu.matmul %207, %206, %cst_78 {dimension_numbers = #tpu.dot_dimension_numbers<[1], [0], [0], [1], [0, 0, 1, 1], [], []>} : vector<4x4xf32>, vector<4x256xf32>, vector<4x256xf32> -> vector<4x256xf32>
    %209 = arith.addf %200, %208 : vector<4x256xf32>
    %c0_79 = arith.constant 0 : index
    %c0_80 = arith.constant 0 : index
    %210 = vector.load %arg15[%c0_79, %c0_80] : memref<4x1xf32, #tpu.memory_space<vmem>>, vector<4x1xf32>
    %211 = vector.broadcast %210 : vector<4x1xf32> to vector<4x256xf32>
    %212 = arith.addf %209, %211 : vector<4x256xf32>
    %213 = tpu.concatenate %13, %212 in 0 : vector<8x256xf32>, vector<4x256xf32> -> vector<12x256xf32>
    %214 = arith.truncf %213 : vector<12x256xf32> to vector<12x256xbf16>
    %c0_81 = arith.constant 0 : index
    %c0_82 = arith.constant 0 : index
    %215 = vector.load %arg16[%c0_81, %c0_82] : memref<8x12xbf16, #tpu.memory_space<vmem>>, vector<8x12xbf16>
    %cst_83 = arith.constant dense<0.000000e+00> : vector<8x256xf32>
    %216 = tpu.matmul %215, %214, %cst_83 {dimension_numbers = #tpu.dot_dimension_numbers<[1], [0], [0], [1], [0, 0, 1, 1], [], []>} : vector<8x12xbf16>, vector<12x256xbf16>, vector<8x256xf32> -> vector<8x256xf32>
    %c0_84 = arith.constant 0 : index
    %c0_85 = arith.constant 0 : index
    %217 = vector.load %arg17[%c0_84, %c0_85] : memref<8x1xf32, #tpu.memory_space<vmem>>, vector<8x1xf32>
    %218 = vector.broadcast %217 : vector<8x1xf32> to vector<8x256xf32>
    %219 = arith.addf %216, %218 : vector<8x256xf32>
    %220 = arith.negf %219 : vector<8x256xf32>
    %221 = math.exp %220 : vector<8x256xf32>
    %cst_86 = arith.constant 1.000000e+00 : f32
    %222 = vector.broadcast %cst_86 : f32 to vector<8x256xf32>
    %223 = arith.addf %222, %221 : vector<8x256xf32>
    %224 = arith.divf %222, %223 : vector<8x256xf32>
    %225 = arith.mulf %219, %224 : vector<8x256xf32>
    %c0_87 = arith.constant 0 : index
    %c0_88 = arith.constant 0 : index
    %c0_89 = arith.constant 0 : index
    %226 = vector.load %arg18[%c0_87, %c0_88, %c0_89] : memref<1x8x256xf32, #tpu.memory_space<vmem>>, vector<1x8x256xf32>
    %227 = vector.shape_cast %226 : vector<1x8x256xf32> to vector<8x256xf32>
    %228 = vector.shape_cast %225 : vector<8x256xf32> to vector<1x8x256xf32>
    tpu.vector_store %arg18[%c0_87, %c0_88, %c0_89], %228 {strides = array<i32>} : memref<1x8x256xf32, #tpu.memory_space<vmem>>, vector<1x8x256xf32>,
    return
  }
  func.func @transform_0(%arg0: i32) -> (i32, i32, i32) {
    %c0_i32 = arith.constant 0 : i32
    %c0_i32_0 = arith.constant 0 : i32
    %c0_i32_1 = arith.constant 0 : i32
    return %arg0, %c0_i32, %c0_i32_0 : i32, i32, i32
  }
  func.func @transform_1(%arg0: i32) -> (i32, i32) {
    %c0_i32 = arith.constant 0 : i32
    %c0_i32_0 = arith.constant 0 : i32
    %c0_i32_1 = arith.constant 0 : i32
    return %c0_i32, %c0_i32_0 : i32, i32
  }
  func.func @transform_2(%arg0: i32) -> (i32, i32) {
    %c0_i32 = arith.constant 0 : i32
    %c0_i32_0 = arith.constant 0 : i32
    %c0_i32_1 = arith.constant 0 : i32
    return %c0_i32, %c0_i32_0 : i32, i32
  }
  func.func @transform_3(%arg0: i32) -> (i32, i32) {
    %c0_i32 = arith.constant 0 : i32
    %c0_i32_0 = arith.constant 0 : i32
    %c0_i32_1 = arith.constant 0 : i32
    return %c0_i32, %c0_i32_0 : i32, i32
  }
  func.func @transform_4(%arg0: i32) -> (i32, i32) {
    %c0_i32 = arith.constant 0 : i32
    %c0_i32_0 = arith.constant 0 : i32
    %c0_i32_1 = arith.constant 0 : i32
    return %c0_i32, %c0_i32_0 : i32, i32
  }
  func.func @transform_5(%arg0: i32) -> (i32, i32) {
    %c0_i32 = arith.constant 0 : i32
    %c0_i32_0 = arith.constant 0 : i32
    %c0_i32_1 = arith.constant 0 : i32
    return %c0_i32, %c0_i32_0 : i32, i32
  }
  func.func @transform_6(%arg0: i32) -> (i32, i32) {
    %c0_i32 = arith.constant 0 : i32
    %c0_i32_0 = arith.constant 0 : i32
    %c0_i32_1 = arith.constant 0 : i32
    return %c0_i32, %c0_i32_0 : i32, i32
  }
  func.func @transform_7(%arg0: i32) -> (i32, i32) {
    %c0_i32 = arith.constant 0 : i32
    %c0_i32_0 = arith.constant 0 : i32
    %c0_i32_1 = arith.constant 0 : i32
    return %c0_i32, %c0_i32_0 : i32, i32
  }
  func.func @transform_8(%arg0: i32) -> (i32, i32) {
    %c0_i32 = arith.constant 0 : i32
    %c0_i32_0 = arith.constant 0 : i32
    %c0_i32_1 = arith.constant 0 : i32
    return %c0_i32, %c0_i32_0 : i32, i32
  }
  func.func @transform_9(%arg0: i32) -> (i32, i32) {
    %c0_i32 = arith.constant 0 : i32
    %c0_i32_0 = arith.constant 0 : i32
    %c0_i32_1 = arith.constant 0 : i32
    return %c0_i32, %c0_i32_0 : i32, i32
  }
  func.func @transform_10(%arg0: i32) -> (i32, i32) {
    %c0_i32 = arith.constant 0 : i32
    %c0_i32_0 = arith.constant 0 : i32
    %c0_i32_1 = arith.constant 0 : i32
    return %c0_i32, %c0_i32_0 : i32, i32
  }
  func.func @transform_11(%arg0: i32) -> (i32, i32) {
    %c0_i32 = arith.constant 0 : i32
    %c0_i32_0 = arith.constant 0 : i32
    %c0_i32_1 = arith.constant 0 : i32
    return %c0_i32, %c0_i32_0 : i32, i32
  }
  func.func @transform_12(%arg0: i32) -> (i32, i32) {
    %c0_i32 = arith.constant 0 : i32
    %c0_i32_0 = arith.constant 0 : i32
    %c0_i32_1 = arith.constant 0 : i32
    return %c0_i32, %c0_i32_0 : i32, i32
  }
  func.func @transform_13(%arg0: i32) -> (i32, i32) {
    %c0_i32 = arith.constant 0 : i32
    %c0_i32_0 = arith.constant 0 : i32
    %c0_i32_1 = arith.constant 0 : i32
    return %c0_i32, %c0_i32_0 : i32, i32
  }
  func.func @transform_14(%arg0: i32) -> (i32, i32) {
    %c0_i32 = arith.constant 0 : i32
    %c0_i32_0 = arith.constant 0 : i32
    %c0_i32_1 = arith.constant 0 : i32
    return %c0_i32, %c0_i32_0 : i32, i32
  }
  func.func @transform_15(%arg0: i32) -> (i32, i32) {
    %c0_i32 = arith.constant 0 : i32
    %c0_i32_0 = arith.constant 0 : i32
    %c0_i32_1 = arith.constant 0 : i32
    return %c0_i32, %c0_i32_0 : i32, i32
  }
  func.func @transform_16(%arg0: i32) -> (i32, i32) {
    %c0_i32 = arith.constant 0 : i32
    %c0_i32_0 = arith.constant 0 : i32
    %c0_i32_1 = arith.constant 0 : i32
    return %c0_i32, %c0_i32_0 : i32, i32
  }
  func.func @transform_17(%arg0: i32) -> (i32, i32, i32) {
    %c0_i32 = arith.constant 0 : i32
    %c0_i32_0 = arith.constant 0 : i32
    %c0_i32_1 = arith.constant 0 : i32
    return %arg0, %c0_i32, %c0_i32_0 : i32, i32, i32
  }
}

</mosaic_0001>

<llo_original>
// kernel: c2f_saconv2d_forward.1
$region0: #{c2f_saconv2d_forward.1}
  #allocation0 [shape = 'u32[]', space=smem, size = 0x4, offset = 0x4, fixed_abs, tag = 'smem constant byte address 0x4 - core index']
  #allocation1 [shape = 'u32[144,128]{1,0:T(1,128)}', space=vmem, size = 0x12000, scoped, tag = 'internal scratch']
  #allocation2 [shape = 'f32[1,1]{1,0:T(1,128)S(1)}', space=vmem, size = 0x200, scoped, tag = 'scoped memory for c2f_saconv2d_forward.1']
  %s0 = inlined_call_operand.vmem [shape: bf16[2,4,256], index: 0, kind: input, shape index: {}]
  %s1 = inlined_call_operand.vmem [shape: f32[1,256], index: 1, kind: input, shape index: {}]
  %s2 = inlined_call_operand.vmem [shape: f32[256,256], index: 2, kind: input, shape index: {}]
  %s3 = inlined_call_operand.vmem [shape: bf16[8,4], index: 3, kind: input, shape index: {}]
  %s4 = inlined_call_operand.vmem [shape: f32[8,1], index: 4, kind: input, shape index: {}]
  %s5 = inlined_call_operand.vmem [shape: bf16[4,36], index: 5, kind: input, shape index: {}]
  %s6 = inlined_call_operand.vmem [shape: f32[4,1], index: 6, kind: input, shape index: {}]
  %s7 = inlined_call_operand.vmem [shape: f32[4,4], index: 7, kind: input, shape index: {}]
  %s8 = inlined_call_operand.vmem [shape: f32[4,1], index: 8, kind: input, shape index: {}]
  %s9 = inlined_call_operand.vmem [shape: f32[4,1], index: 9, kind: input, shape index: {}]
  %s10 = inlined_call_operand.<no memory space> [shape: f32[1,1], index: 10, kind: input, shape index: {}]
  %s11 = inlined_call_operand.vmem [shape: bf16[4,36], index: 11, kind: input, shape index: {}]
  %s12 = inlined_call_operand.vmem [shape: bf16[4,36], index: 12, kind: input, shape index: {}]
  %s13 = inlined_call_operand.vmem [shape: f32[4,4], index: 13, kind: input, shape index: {}]
  %s14 = inlined_call_operand.vmem [shape: f32[4,1], index: 14, kind: input, shape index: {}]
  %s15 = inlined_call_operand.vmem [shape: bf16[8,12], index: 15, kind: input, shape index: {}]
  %s16 = inlined_call_operand.vmem [shape: f32[8,1], index: 16, kind: input, shape index: {}]
  %s17 = inlined_call_operand.vmem [shape: f32[2,8,256], index: 17, kind: output, shape index: {}]
  %s18 = sld [smem:[#allocation0]]
  $region101: #{c2f_saconv2d_forward.1} parent=0
    _
  %s20 = ssub.s32 1, %s18
  %s21 = scalar_select 0, %s20, %s18
  %v22 = vstv %s10
  %23 = vst [vmem:[#allocation2] sm:$0x1] %v22
  loop: start=0, step=1, limit=4
  $region2: #{c2f_saconv2d_forward.1} parent=0 // loop_pre_header
    _
  $region3: #{c2f_saconv2d_forward.1} parent=0 // loop_header
    %s25 = sphi 0, %s29
    %p26 = scmp.ge.s32.totalorder %s25, 4
    %s35 = sphi 0, %s37
    %s38 = sphi 0, %s35
    %s39 = sphi 0, %s38
    %s55 = sphi 0, %s39
    %s59 = sphi 0, %s59
    %s61 = sphi 0, %s59
    %s62 = sphi 0, %s61
    %s76 = sphi 0, %s62
    %s80 = sphi 0, %s80
    %s82 = sphi 0, %s80
    %s83 = sphi 0, %s82
    %s97 = sphi 0, %s83
    %s101 = sphi 0, %s101
    %s103 = sphi 0, %s101
    %s104 = sphi 0, %s103
    %s118 = sphi 0, %s104
    %s122 = sphi 0, %s122
    %s124 = sphi 0, %s122
    %s125 = sphi 0, %s124
    %s139 = sphi 0, %s125
    %s143 = sphi 0, %s143
    %s145 = sphi 0, %s143
    %s146 = sphi 0, %s145
    %s160 = sphi 0, %s146
    %s164 = sphi 0, %s164
    %s166 = sphi 0, %s164
    %s167 = sphi 0, %s166
    %s181 = sphi 0, %s167
    %s185 = sphi 0, %s185
    %s187 = sphi 0, %s185
    %s188 = sphi 0, %s187
    %s202 = sphi 0, %s188
    %s206 = sphi 0, %s206
    %s208 = sphi 0, %s206
    %s209 = sphi 0, %s208
    %s223 = sphi 0, %s209
    %s227 = sphi 0, %s227
    %s229 = sphi 0, %s227
    %s230 = sphi 0, %s229
    %s244 = sphi 0, %s230
    %s248 = sphi 0, %s248
    %s250 = sphi 0, %s248
    %s251 = sphi 0, %s250
    %s265 = sphi 0, %s251
    %s269 = sphi 0, %s269
    %s271 = sphi 0, %s269
    %s272 = sphi 0, %s271
    %s286 = sphi 0, %s272
    %s290 = sphi 0, %s290
    %s292 = sphi 0, %s290
    %s293 = sphi 0, %s292
    %s307 = sphi 0, %s293
    %s311 = sphi 0, %s311
    %s313 = sphi 0, %s311
    %s314 = sphi 0, %s313
    %s328 = sphi 0, %s314
    %s332 = sphi 0, %s332
    %s334 = sphi 0, %s332
    %s335 = sphi 0, %s334
    %s349 = sphi 0, %s335
    %s353 = sphi 0, %s353
    %s355 = sphi 0, %s353
    %s356 = sphi 0, %s355
    %s370 = sphi 0, %s356
    %s374 = sphi 0, %s374
    %s376 = sphi 0, %s374
    %s377 = sphi 0, %s376
    %s391 = sphi 0, %s377
    %s397 = sphi 0, %s399
    %s400 = sphi 0, %s397
    %s401 = sphi 0, %s400
    %s417 = sphi 0, %s401
  $region4: #{c2f_saconv2d_forward.1} parent=0 // loop_header_branch
    %28 = sbr.rel (%p26) target = $region8
  $region5: #{c2f_saconv2d_forward.1} parent=0 // loop_body
    %s30 = ssub.s32 %s25, 1
    %s31 = ssub.s32 %s25, 2
    %s32 = sadd.s32 %s25, 1
    %s33 = ssub.s32 %s25, %s32
    %p34 = scmp.eq.s32.totalorder %s33, 0
    %s36 = sadd.s32 %s35, 1
    %s37 = scalar_select %p34, %s35, %s36
    %p40 = pneg %p34
    %p41 = scmp.eq.s32.totalorder %s25, 1
    %p42 = por %p40, %p41
    %p43 = scmp.ne.s32.totalorder %s35, %s38
    %p44 = scmp.eq.s32.totalorder %s25, 0
    %p45 = por %p43, %p44
    %p46 = scmp.ne.s32.totalorder %s35, %s38
    %p47 = scmp.eq.s32.totalorder %s30, 1
    %p48 = por %p46, %p47
    %p49 = scmp.ne.s32.totalorder %s38, %s39
    %p50 = scmp.eq.s32.totalorder %s30, 0
    %p51 = por %p49, %p50
    %p52 = scmp.ne.s32.totalorder %s38, %s39
    %p53 = scmp.eq.s32.totalorder %s31, 1
    %p54 = por %p52, %p53
    %p56 = scmp.ne.s32.totalorder %s39, %s55
    %p57 = scmp.eq.s32.totalorder %s31, 0
    %p58 = por %p56, %p57
    %s60 = sadd.s32 %s59, 1
    %p63 = scmp.eq.s32.totalorder %s25, 1
    %p64 = scmp.ne.s32.totalorder %s59, %s61
    %p65 = scmp.eq.s32.totalorder %s25, 0
    %p66 = por %p64, %p65
    %p67 = scmp.ne.s32.totalorder %s59, %s61
    %p68 = scmp.eq.s32.totalorder %s30, 1
    %p69 = por %p67, %p68
    %p70 = scmp.ne.s32.totalorder %s61, %s62
    %p71 = scmp.eq.s32.totalorder %s30, 0
    %p72 = por %p70, %p71
    %p73 = scmp.ne.s32.totalorder %s61, %s62
    %p74 = scmp.eq.s32.totalorder %s31, 1
    %p75 = por %p73, %p74
    %p77 = scmp.ne.s32.totalorder %s62, %s76
    %p78 = scmp.eq.s32.totalorder %s31, 0
    %p79 = por %p77, %p78
    %s81 = sadd.s32 %s80, 1
    %p84 = scmp.eq.s32.totalorder %s25, 1
    %p85 = scmp.ne.s32.totalorder %s80, %s82
    %p86 = scmp.eq.s32.totalorder %s25, 0
    %p87 = por %p85, %p86
    %p88 = scmp.ne.s32.totalorder %s80, %s82
    %p89 = scmp.eq.s32.totalorder %s30, 1
    %p90 = por %p88, %p89
    %p91 = scmp.ne.s32.totalorder %s82, %s83
    %p92 = scmp.eq.s32.totalorder %s30, 0
    %p93 = por %p91, %p92
    %p94 = scmp.ne.s32.totalorder %s82, %s83
    %p95 = scmp.eq.s32.totalorder %s31, 1
    %p96 = por %p94, %p95
    %p98 = scmp.ne.s32.totalorder %s83, %s97
    %p99 = scmp.eq.s32.totalorder %s31, 0
    %p100 = por %p98, %p99
    %s102 = sadd.s32 %s101, 1
    %p105 = scmp.eq.s32.totalorder %s25, 1
    %p106 = scmp.ne.s32.totalorder %s101, %s103
    %p107 = scmp.eq.s32.totalorder %s25, 0
    %p108 = por %p106, %p107
    %p109 = scmp.ne.s32.totalorder %s101, %s103
    %p110 = scmp.eq.s32.totalorder %s30, 1
    %p111 = por %p109, %p110
    %p112 = scmp.ne.s32.totalorder %s103, %s104
    %p113 = scmp.eq.s32.totalorder %s30, 0
    %p114 = por %p112, %p113
    %p115 = scmp.ne.s32.totalorder %s103, %s104
    %p116 = scmp.eq.s32.totalorder %s31, 1
    %p117 = por %p115, %p116
    %p119 = scmp.ne.s32.totalorder %s104, %s118
    %p120 = scmp.eq.s32.totalorder %s31, 0
    %p121 = por %p119, %p120
    %s123 = sadd.s32 %s122, 1
    %p126 = scmp.eq.s32.totalorder %s25, 1
    %p127 = scmp.ne.s32.totalorder %s122, %s124
    %p128 = scmp.eq.s32.totalorder %s25, 0
    %p129 = por %p127, %p128
    %p130 = scmp.ne.s32.totalorder %s122, %s124
    %p131 = scmp.eq.s32.totalorder %s30, 1
    %p132 = por %p130, %p131
    %p133 = scmp.ne.s32.totalorder %s124, %s125
    %p134 = scmp.eq.s32.totalorder %s30, 0
    %p135 = por %p133, %p134
    %p136 = scmp.ne.s32.totalorder %s124, %s125
    %p137 = scmp.eq.s32.totalorder %s31, 1
    %p138 = por %p136, %p137
    %p140 = scmp.ne.s32.totalorder %s125, %s139
    %p141 = scmp.eq.s32.totalorder %s31, 0
    %p142 = por %p140, %p141
    %s144 = sadd.s32 %s143, 1
    %p147 = scmp.eq.s32.totalorder %s25, 1
    %p148 = scmp.ne.s32.totalorder %s143, %s145
    %p149 = scmp.eq.s32.totalorder %s25, 0
    %p150 = por %p148, %p149
    %p151 = scmp.ne.s32.totalorder %s143, %s145
    %p152 = scmp.eq.s32.totalorder %s30, 1
    %p153 = por %p151, %p152
    %p154 = scmp.ne.s32.totalorder %s145, %s146
    %p155 = scmp.eq.s32.totalorder %s30, 0
    %p156 = por %p154, %p155
    %p157 = scmp.ne.s32.totalorder %s145, %s146
    %p158 = scmp.eq.s32.totalorder %s31, 1
    %p159 = por %p157, %p158
    %p161 = scmp.ne.s32.totalorder %s146, %s160
    %p162 = scmp.eq.s32.totalorder %s31, 0
    %p163 = por %p161, %p162
    %s165 = sadd.s32 %s164, 1
    %p168 = scmp.eq.s32.totalorder %s25, 1
    %p169 = scmp.ne.s32.totalorder %s164, %s166
    %p170 = scmp.eq.s32.totalorder %s25, 0
    %p171 = por %p169, %p170
    %p172 = scmp.ne.s32.totalorder %s164, %s166
    %p173 = scmp.eq.s32.totalorder %s30, 1
    %p174 = por %p172, %p173
    %p175 = scmp.ne.s32.totalorder %s166, %s167
    %p176 = scmp.eq.s32.totalorder %s30, 0
    %p177 = por %p175, %p176
    %p178 = scmp.ne.s32.totalorder %s166, %s167
    %p179 = scmp.eq.s32.totalorder %s31, 1
    %p180 = por %p178, %p179
    %p182 = scmp.ne.s32.totalorder %s167, %s181
    %p183 = scmp.eq.s32.totalorder %s31, 0
    %p184 = por %p182, %p183
    %s186 = sadd.s32 %s185, 1
    %p189 = scmp.eq.s32.totalorder %s25, 1
    %p190 = scmp.ne.s32.totalorder %s185, %s187
    %p191 = scmp.eq.s32.totalorder %s25, 0
    %p192 = por %p190, %p191
    %p193 = scmp.ne.s32.totalorder %s185, %s187
    %p194 = scmp.eq.s32.totalorder %s30, 1
    %p195 = por %p193, %p194
    %p196 = scmp.ne.s32.totalorder %s187, %s188
    %p197 = scmp.eq.s32.totalorder %s30, 0
    %p198 = por %p196, %p197
    %p199 = scmp.ne.s32.totalorder %s187, %s188
    %p200 = scmp.eq.s32.totalorder %s31, 1
    %p201 = por %p199, %p200
    %p203 = scmp.ne.s32.totalorder %s188, %s202
    %p204 = scmp.eq.s32.totalorder %s31, 0
    %p205 = por %p203, %p204
    %s207 = sadd.s32 %s206, 1
    %p210 = scmp.eq.s32.totalorder %s25, 1
    %p211 = scmp.ne.s32.totalorder %s206, %s208
    %p212 = scmp.eq.s32.totalorder %s25, 0
    %p213 = por %p211, %p212
    %p214 = scmp.ne.s32.totalorder %s206, %s208
    %p215 = scmp.eq.s32.totalorder %s30, 1
    %p216 = por %p214, %p215
    %p217 = scmp.ne.s32.totalorder %s208, %s209
    %p218 = scmp.eq.s32.totalorder %s30, 0
    %p219 = por %p217, %p218
    %p220 = scmp.ne.s32.totalorder %s208, %s209
    %p221 = scmp.eq.s32.totalorder %s31, 1
    %p222 = por %p220, %p221
    %p224 = scmp.ne.s32.totalorder %s209, %s223
    %p225 = scmp.eq.s32.totalorder %s31, 0
    %p226 = por %p224, %p225
    %s228 = sadd.s32 %s227, 1
    %p231 = scmp.eq.s32.totalorder %s25, 1
    %p232 = scmp.ne.s32.totalorder %s227, %s229
    %p233 = scmp.eq.s32.totalorder %s25, 0
    %p234 = por %p232, %p233
    %p235 = scmp.ne.s32.totalorder %s227, %s229
    %p236 = scmp.eq.s32.totalorder %s30, 1
    %p237 = por %p235, %p236
    %p238 = scmp.ne.s32.totalorder %s229, %s230
    %p239 = scmp.eq.s32.totalorder %s30, 0
    %p240 = por %p238, %p239
    %p241 = scmp.ne.s32.totalorder %s229, %s230
    %p242 = scmp.eq.s32.totalorder %s31, 1
    %p243 = por %p241, %p242
    %p245 = scmp.ne.s32.totalorder %s230, %s244
    %p246 = scmp.eq.s32.totalorder %s31, 0
    %p247 = por %p245, %p246
    %s249 = sadd.s32 %s248, 1
    %p252 = scmp.eq.s32.totalorder %s25, 1
    %p253 = scmp.ne.s32.totalorder %s248, %s250
    %p254 = scmp.eq.s32.totalorder %s25, 0
    %p255 = por %p253, %p254
    %p256 = scmp.ne.s32.totalorder %s248, %s250
    %p257 = scmp.eq.s32.totalorder %s30, 1
    %p258 = por %p256, %p257
    %p259 = scmp.ne.s32.totalorder %s250, %s251
    %p260 = scmp.eq.s32.totalorder %s30, 0
    %p261 = por %p259, %p260
    %p262 = scmp.ne.s32.totalorder %s250, %s251
    %p263 = scmp.eq.s32.totalorder %s31, 1
    %p264 = por %p262, %p263
    %p266 = scmp.ne.s32.totalorder %s251, %s265
    %p267 = scmp.eq.s32.totalorder %s31, 0
    %p268 = por %p266, %p267
    %s270 = sadd.s32 %s269, 1
    %p273 = scmp.eq.s32.totalorder %s25, 1
    %p274 = scmp.ne.s32.totalorder %s269, %s271
    %p275 = scmp.eq.s32.totalorder %s25, 0
    %p276 = por %p274, %p275
    %p277 = scmp.ne.s32.totalorder %s269, %s271
    %p278 = scmp.eq.s32.totalorder %s30, 1
    %p279 = por %p277, %p278
    %p280 = scmp.ne.s32.totalorder %s271, %s272
    %p281 = scmp.eq.s32.totalorder %s30, 0
    %p282 = por %p280, %p281
    %p283 = scmp.ne.s32.totalorder %s271, %s272
    %p284 = scmp.eq.s32.totalorder %s31, 1
    %p285 = por %p283, %p284
    %p287 = scmp.ne.s32.totalorder %s272, %s286
    %p288 = scmp.eq.s32.totalorder %s31, 0
    %p289 = por %p287, %p288
    %s291 = sadd.s32 %s290, 1
    %p294 = scmp.eq.s32.totalorder %s25, 1
    %p295 = scmp.ne.s32.totalorder %s290, %s292
    %p296 = scmp.eq.s32.totalorder %s25, 0
    %p297 = por %p295, %p296
    %p298 = scmp.ne.s32.totalorder %s290, %s292
    %p299 = scmp.eq.s32.totalorder %s30, 1
    %p300 = por %p298, %p299
    %p301 = scmp.ne.s32.totalorder %s292, %s293
    %p302 = scmp.eq.s32.totalorder %s30, 0
    %p303 = por %p301, %p302
    %p304 = scmp.ne.s32.totalorder %s292, %s293
    %p305 = scmp.eq.s32.totalorder %s31, 1
    %p306 = por %p304, %p305
    %p308 = scmp.ne.s32.totalorder %s293, %s307
    %p309 = scmp.eq.s32.totalorder %s31, 0
    %p310 = por %p308, %p309
    %s312 = sadd.s32 %s311, 1
    %p315 = scmp.eq.s32.totalorder %s25, 1
    %p316 = scmp.ne.s32.totalorder %s311, %s313
    %p317 = scmp.eq.s32.totalorder %s25, 0
    %p318 = por %p316, %p317
    %p319 = scmp.ne.s32.totalorder %s311, %s313
    %p320 = scmp.eq.s32.totalorder %s30, 1
    %p321 = por %p319, %p320
    %p322 = scmp.ne.s32.totalorder %s313, %s314
    %p323 = scmp.eq.s32.totalorder %s30, 0
    %p324 = por %p322, %p323
    %p325 = scmp.ne.s32.totalorder %s313, %s314
    %p326 = scmp.eq.s32.totalorder %s31, 1
    %p327 = por %p325, %p326
    %p329 = scmp.ne.s32.totalorder %s314, %s328
    %p330 = scmp.eq.s32.totalorder %s31, 0
    %p331 = por %p329, %p330
    %s333 = sadd.s32 %s332, 1
    %p336 = scmp.eq.s32.totalorder %s25, 1
    %p337 = scmp.ne.s32.totalorder %s332, %s334
    %p338 = scmp.eq.s32.totalorder %s25, 0
    %p339 = por %p337, %p338
    %p340 = scmp.ne.s32.totalorder %s332, %s334
    %p341 = scmp.eq.s32.totalorder %s30, 1
    %p342 = por %p340, %p341
    %p343 = scmp.ne.s32.totalorder %s334, %s335
    %p344 = scmp.eq.s32.totalorder %s30, 0
    %p345 = por %p343, %p344
    %p346 = scmp.ne.s32.totalorder %s334, %s335
    %p347 = scmp.eq.s32.totalorder %s31, 1
    %p348 = por %p346, %p347
    %p350 = scmp.ne.s32.totalorder %s335, %s349
    %p351 = scmp.eq.s32.totalorder %s31, 0
    %p352 = por %p350, %p351
    %s354 = sadd.s32 %s353, 1
    %p357 = scmp.eq.s32.totalorder %s25, 1
    %p358 = scmp.ne.s32.totalorder %s353, %s355
    %p359 = scmp.eq.s32.totalorder %s25, 0
    %p360 = por %p358, %p359
    %p361 = scmp.ne.s32.totalorder %s353, %s355
    %p362 = scmp.eq.s32.totalorder %s30, 1
    %p363 = por %p361, %p362
    %p364 = scmp.ne.s32.totalorder %s355, %s356
    %p365 = scmp.eq.s32.totalorder %s30, 0
    %p366 = por %p364, %p365
    %p367 = scmp.ne.s32.totalorder %s355, %s356
    %p368 = scmp.eq.s32.totalorder %s31, 1
    %p369 = por %p367, %p368
    %p371 = scmp.ne.s32.totalorder %s356, %s370
    %p372 = scmp.eq.s32.totalorder %s31, 0
    %p373 = por %p371, %p372
    %s375 = sadd.s32 %s374, 1
    %p378 = scmp.eq.s32.totalorder %s25, 1
    %p379 = scmp.ne.s32.totalorder %s374, %s376
    %p380 = scmp.eq.s32.totalorder %s25, 0
    %p381 = por %p379, %p380
    %p382 = scmp.ne.s32.totalorder %s374, %s376
    %p383 = scmp.eq.s32.totalorder %s30, 1
    %p384 = por %p382, %p383
    %p385 = scmp.ne.s32.totalorder %s376, %s377
    %p386 = scmp.eq.s32.totalorder %s30, 0
    %p387 = por %p385, %p386
    %p388 = scmp.ne.s32.totalorder %s376, %s377
    %p389 = scmp.eq.s32.totalorder %s31, 1
    %p390 = por %p388, %p389
    %p392 = scmp.ne.s32.totalorder %s377, %s391
    %p393 = scmp.eq.s32.totalorder %s31, 0
    %p394 = por %p392, %p393
    %s395 = ssub.s32 %s25, %s32
    %p396 = scmp.eq.s32.totalorder %s395, 0
    %s398 = sadd.s32 %s397, 1
    %s399 = scalar_select %p396, %s397, %s398
    %p402 = pneg %p396
    %p403 = scmp.eq.s32.totalorder %s25, 1
    %p404 = por %p402, %p403
    %p405 = scmp.ne.s32.totalorder %s397, %s400
    %p406 = scmp.eq.s32.totalorder %s25, 0
    %p407 = por %p405, %p406
    %p408 = scmp.ne.s32.totalorder %s397, %s400
    %p409 = scmp.eq.s32.totalorder %s30, 1
    %p410 = por %p408, %p409
    %p411 = scmp.ne.s32.totalorder %s400, %s401
    %p412 = scmp.eq.s32.totalorder %s30, 0
    %p413 = por %p411, %p412
    %p414 = scmp.ne.s32.totalorder %s400, %s401
    %p415 = scmp.eq.s32.totalorder %s31, 1
    %p416 = por %p414, %p415
    %p418 = scmp.ne.s32.totalorder %s401, %s417
    %p419 = scmp.eq.s32.totalorder %s31, 0
    %p420 = por %p418, %p419
    %p421 = scmp.le.s32.totalorder 1, %s25
    %p422 = scmp.lt.s32.totalorder %s25, 3
    %p423 = pnand %p421, %p422
    %p424 = pneg %p423
    // Predicated region
    $region9: #{c2f_saconv2d_forward.1} parent=5 // pred_check
      _
    $region10: #{c2f_saconv2d_forward.1} parent=5 // pred_check_branch
      %426 = sbr.rel (%p423) target = $region12
    $region11: #{c2f_saconv2d_forward.1} parent=5 // pred_region
      %s427 = ssub.s32 %s25, 1
      // Predicated region
      $region13: #{c2f_saconv2d_forward.1} parent=11 // pred_check
        %p428 = pneg %p72
      $region14: #{c2f_saconv2d_forward.1} parent=11 // pred_check_branch
        %430 = sbr.rel (%p428) target = $region16
      $region15: #{c2f_saconv2d_forward.1} parent=11 // pred_region
        _
      $region16: #{c2f_saconv2d_forward.1} parent=11 // pred_fallthru
        _
      // Predicated region
      $region17: #{c2f_saconv2d_forward.1} parent=11 // pred_check
        %p431 = pneg %p93
      $region18: #{c2f_saconv2d_forward.1} parent=11 // pred_check_branch
        %433 = sbr.rel (%p431) target = $region20
      $region19: #{c2f_saconv2d_forward.1} parent=11 // pred_region
        _
      $region20: #{c2f_saconv2d_forward.1} parent=11 // pred_fallthru
        _
      // Predicated region
      $region21: #{c2f_saconv2d_forward.1} parent=11 // pred_check
        %p434 = pneg %p114
      $region22: #{c2f_saconv2d_forward.1} parent=11 // pred_check_branch
        %436 = sbr.rel (%p434) target = $region24
      $region23: #{c2f_saconv2d_forward.1} parent=11 // pred_region
        _
      $region24: #{c2f_saconv2d_forward.1} parent=11 // pred_fallthru
        _
      // Predicated region
      $region25: #{c2f_saconv2d_forward.1} parent=11 // pred_check
        %p437 = pneg %p135
      $region26: #{c2f_saconv2d_forward.1} parent=11 // pred_check_branch
        %439 = sbr.rel (%p437) target = $region28
      $region27: #{c2f_saconv2d_forward.1} parent=11 // pred_region
        _
      $region28: #{c2f_saconv2d_forward.1} parent=11 // pred_fallthru
        _
      // Predicated region
      $region29: #{c2f_saconv2d_forward.1} parent=11 // pred_check
        %p440 = pneg %p156
      $region30: #{c2f_saconv2d_forward.1} parent=11 // pred_check_branch
        %442 = sbr.rel (%p440) target = $region32
      $region31: #{c2f_saconv2d_forward.1} parent=11 // pred_region
        _
      $region32: #{c2f_saconv2d_forward.1} parent=11 // pred_fallthru
        _
      // Predicated region
      $region33: #{c2f_saconv2d_forward.1} parent=11 // pred_check
        %p443 = pneg %p177
      $region34: #{c2f_saconv2d_forward.1} parent=11 // pred_check_branch
        %445 = sbr.rel (%p443) target = $region36
      $region35: #{c2f_saconv2d_forward.1} parent=11 // pred_region
        _
      $region36: #{c2f_saconv2d_forward.1} parent=11 // pred_fallthru
        _
      // Predicated region
      $region37: #{c2f_saconv2d_forward.1} parent=11 // pred_check
        %p446 = pneg %p198
      $region38: #{c2f_saconv2d_forward.1} parent=11 // pred_check_branch
        %448 = sbr.rel (%p446) target = $region40
      $region39: #{c2f_saconv2d_forward.1} parent=11 // pred_region
        _
      $region40: #{c2f_saconv2d_forward.1} parent=11 // pred_fallthru
        _
      // Predicated region
      $region41: #{c2f_saconv2d_forward.1} parent=11 // pred_check
        %p449 = pneg %p219
      $region42: #{c2f_saconv2d_forward.1} parent=11 // pred_check_branch
        %451 = sbr.rel (%p449) target = $region44
      $region43: #{c2f_saconv2d_forward.1} parent=11 // pred_region
        _
      $region44: #{c2f_saconv2d_forward.1} parent=11 // pred_fallthru
        _
      // Predicated region
      $region45: #{c2f_saconv2d_forward.1} parent=11 // pred_check
        %p452 = pneg %p240
      $region46: #{c2f_saconv2d_forward.1} parent=11 // pred_check_branch
        %454 = sbr.rel (%p452) target = $region48
      $region47: #{c2f_saconv2d_forward.1} parent=11 // pred_region
        _
      $region48: #{c2f_saconv2d_forward.1} parent=11 // pred_fallthru
        _
      // Predicated region
      $region49: #{c2f_saconv2d_forward.1} parent=11 // pred_check
        %p455 = pneg %p261
      $region50: #{c2f_saconv2d_forward.1} parent=11 // pred_check_branch
        %457 = sbr.rel (%p455) target = $region52
      $region51: #{c2f_saconv2d_forward.1} parent=11 // pred_region
        _
      $region52: #{c2f_saconv2d_forward.1} parent=11 // pred_fallthru
        _
      // Predicated region
      $region53: #{c2f_saconv2d_forward.1} parent=11 // pred_check
        %p458 = pneg %p282
      $region54: #{c2f_saconv2d_forward.1} parent=11 // pred_check_branch
        %460 = sbr.rel (%p458) target = $region56
      $region55: #{c2f_saconv2d_forward.1} parent=11 // pred_region
        _
      $region56: #{c2f_saconv2d_forward.1} parent=11 // pred_fallthru
        _
      // Predicated region
      $region57: #{c2f_saconv2d_forward.1} parent=11 // pred_check
        %p461 = pneg %p303
      $region58: #{c2f_saconv2d_forward.1} parent=11 // pred_check_branch
        %463 = sbr.rel (%p461) target = $region60
      $region59: #{c2f_saconv2d_forward.1} parent=11 // pred_region
        _
      $region60: #{c2f_saconv2d_forward.1} parent=11 // pred_fallthru
        _
      // Predicated region
      $region61: #{c2f_saconv2d_forward.1} parent=11 // pred_check
        %p464 = pneg %p324
      $region62: #{c2f_saconv2d_forward.1} parent=11 // pred_check_branch
        %466 = sbr.rel (%p464) target = $region64
      $region63: #{c2f_saconv2d_forward.1} parent=11 // pred_region
        _
      $region64: #{c2f_saconv2d_forward.1} parent=11 // pred_fallthru
        _
      // Predicated region
      $region65: #{c2f_saconv2d_forward.1} parent=11 // pred_check
        %p467 = pneg %p345
      $region66: #{c2f_saconv2d_forward.1} parent=11 // pred_check_branch
        %469 = sbr.rel (%p467) target = $region68
      $region67: #{c2f_saconv2d_forward.1} parent=11 // pred_region
        _
      $region68: #{c2f_saconv2d_forward.1} parent=11 // pred_fallthru
        _
      // Predicated region
      $region69: #{c2f_saconv2d_forward.1} parent=11 // pred_check
        %p470 = pneg %p366
      $region70: #{c2f_saconv2d_forward.1} parent=11 // pred_check_branch
        %472 = sbr.rel (%p470) target = $region72
      $region71: #{c2f_saconv2d_forward.1} parent=11 // pred_region
        _
      $region72: #{c2f_saconv2d_forward.1} parent=11 // pred_fallthru
        _
      // Predicated region
      $region73: #{c2f_saconv2d_forward.1} parent=11 // pred_check
        %p473 = pneg %p387
      $region74: #{c2f_saconv2d_forward.1} parent=11 // pred_check_branch
        %475 = sbr.rel (%p473) target = $region76
      $region75: #{c2f_saconv2d_forward.1} parent=11 // pred_region
        _
      $region76: #{c2f_saconv2d_forward.1} parent=11 // pred_fallthru
        _
    $region12: #{c2f_saconv2d_forward.1} parent=5 // pred_fallthru
      _
    %p476 = scmp.lt.s32.totalorder %s25, 2
    // Predicated region
    $region77: #{c2f_saconv2d_forward.1} parent=5 // pred_check
      %p477 = pneg %p476
    $region78: #{c2f_saconv2d_forward.1} parent=5 // pred_check_branch
      %479 = sbr.rel (%p477) target = $region80
    $region79: #{c2f_saconv2d_forward.1} parent=5 // pred_region
      // Predicated region
      $region81: #{c2f_saconv2d_forward.1} parent=79 // pred_check
        %p480 = pneg %p45
      $region82: #{c2f_saconv2d_forward.1} parent=79 // pred_check_branch
        %482 = sbr.rel (%p480) target = $region84
      $region83: #{c2f_saconv2d_forward.1} parent=79 // pred_region
        %p483 = scmp.lt.s32.totalorder %s25, 1
        %s484 = scalar_select %p483, %s25, 1
        %s485 = smul.addr %s484, 2
        %s486 = smul.addr %s485, 2
        %s487 = scalar_lea.vmem %s0, %s486
      $region84: #{c2f_saconv2d_forward.1} parent=79 // pred_fallthru
        _
    $region80: #{c2f_saconv2d_forward.1} parent=5 // pred_fallthru
      _
    %p488 = scmp.le.s32.totalorder 1, %s25
    %p489 = scmp.lt.s32.totalorder %s25, 3
    %p490 = pnand %p488, %p489
    %p491 = pneg %p490
    // Predicated region
    $region85: #{c2f_saconv2d_forward.1} parent=5 // pred_check
      _
    $region86: #{c2f_saconv2d_forward.1} parent=5 // pred_check_branch
      %493 = sbr.rel (%p490) target = $region88
    $region87: #{c2f_saconv2d_forward.1} parent=5 // pred_region
      %s494 = ssub.s32 %s25, 1
      %p495 = scmp.lt.s32.totalorder %s30, 1
      %s496 = scalar_select %p495, %s30, 1
      %s497 = smul.addr %s496, 2
      %s498 = smul.addr %s497, 2
      %s499 = scalar_lea.vmem %s0, %s498
      %p500 = pneg %p51
      %p501 = pneg %p48
      %p502 = pneg %p72
      %p503 = pneg %p69
      %p504 = pneg %p93
      %p505 = pneg %p90
      %p506 = pneg %p114
      %p507 = pneg %p111
      %p508 = pneg %p135
      %p509 = pneg %p132
      %p510 = pneg %p156
      %p511 = pneg %p153
      %p512 = pneg %p177
      %p513 = pneg %p174
      %p514 = pneg %p198
      %p515 = pneg %p195
      %p516 = pneg %p219
      %p517 = pneg %p216
      %p518 = pneg %p240
      %p519 = pneg %p237
      %p520 = pneg %p261
      %p521 = pneg %p258
      %p522 = pneg %p282
      %p523 = pneg %p279
      %p524 = pneg %p303
      %p525 = pneg %p300
      %p526 = pneg %p324
      %p527 = pneg %p321
      %p528 = pneg %p345
      %p529 = pneg %p342
      %p530 = pneg %p366
      %p531 = pneg %p363
      %p532 = pneg %p387
      %p533 = pneg %p384
      %p534 = pneg %p413
      %p535 = pneg %p410
      %p536 = scmp.lt.s32.totalorder %s30, 1
      %s537 = scalar_select %p536, %s30, 1
      %s538 = smul.addr %s537, 2
      %s539 = smul.addr %s538, 8
      %s540 = scalar_lea.vmem %s17, %s539
      %p541 = scmp.lt.s32.totalorder %s30, 1
      %s542 = scalar_select %p541, %s30, 1
      %s543 = smul.addr %s542, 2
      %s544 = smul.addr %s543, 2
      %s545 = scalar_lea.vmem %s0, %s544
      %p546 = scmp.lt.s32.totalorder %s30, 1
      %s547 = scalar_select %p546, %s30, 1
      %s548 = smul.addr %s547, 2
      %s549 = smul.addr %s548, 8
      %s550 = scalar_lea.vmem %s17, %s549
      %v552 = vld [vmem:[%s1] sm:$0x3]
      %v553 = vld [vmem:[%s3] sm:$0xf]
      %v554 = vld [vmem:[%s545] sm:$0xf]
      %v555 = vld [vmem:[%s4] sm:$0xff]
      %557 = vset.pattern.permute.xlu0 0
      %558 = vperm.xlu0 %557, %v555
      %v559 = vpop.permute.xlu0 %558
      %v563 = vunpack.c.l.s4 1983009808
      %v564 = vunpack.c.0.s8 %v563
      %v565 = vlaneseq
      %v566 = vshrl.u32 %v565, 7
      %v567 = vsub.s32 %v564, %v566
      %v568 = vrot.slane %v554, %v567
      %v569 = vcombine.high %v568, %v568
      %vm570 = vcmask 31744
      %v572 = vsel %vm570, %v553, 0
      %vm574 = vcmask 1041408
      %v576 = vsel %vm574, %v568, 0
      %v579 = vsel %vm574, %v569, 0
      %581 = vmatprep.subr.bf16.mxu0 %v579
      %582 = vmatpush1.bf16.msra.mxu0 %v576
      %583 = vmatprep.subr.bf16.mxu0 0
      %584 = vmatpush1.bf16.msra.mxu0 0
      %585 = vmatprep.subr.bf16.mxu0 0
      %586 = vmatpush1.bf16.msra.mxu0 0
      %587 = vmatprep.subr.bf16.mxu0 0
      %588 = vmatpush1.bf16.msra.mxu0 0
      %589 = vmatprep.subr.bf16.mxu0 0
      %590 = vmatpush1.bf16.msra.mxu0 0
      %591 = vmatprep.subr.bf16.mxu0 0
      %592 = vmatpush1.bf16.msra.mxu0 0
      %593 = vmatprep.subr.bf16.mxu0 0
      %594 = vmatpush1.bf16.msra.mxu0 0
      %595 = vmatprep.subr.bf16.mxu0 0
      %596 = vmatpush1.bf16.msra.mxu0 0
      %597 = vmatprep.subr.bf16.mxu0 0
      %598 = vmatpush1.bf16.msra.mxu0 0
      %599 = vmatprep.subr.bf16.mxu0 0
      %600 = vmatpush1.bf16.msra.mxu0 0
      %601 = vmatprep.subr.bf16.mxu0 0
      %602 = vmatpush1.bf16.msra.mxu0 0
      %603 = vmatprep.subr.bf16.mxu0 0
      %604 = vmatpush1.bf16.msra.mxu0 0
      %605 = vmatprep.subr.bf16.mxu0 0
      %606 = vmatpush1.bf16.msra.mxu0 0
      %607 = vmatprep.subr.bf16.mxu0 0
      %608 = vmatpush1.bf16.msra.mxu0 0
      %609 = vmatprep.subr.bf16.mxu0 0
      %610 = vmatpush1.bf16.msra.mxu0 0
      %611 = vmatprep.subr.bf16.mxu0 0
      %612 = vmatpush1.bf16.msra.mxu0 0
      %613 = vmatprep.mubr.bf16.mxu0 0
      %614 = vmatmul.mubr.bf16.gmra.mrb[0].mxu0 %v572
      %v615 = vpop.f32.mrb[0].mxu0
      %v616 = vadd.f32 %v559, %v615
      %v617 = vpop.f32.mrb[0].mxu0
      %v618 = vadd.f32 %v559, %v617
      %v619 = vpop.f32.mrb[0].mxu0
      %v620 = vpop.f32.mrb[0].mxu0
      %621 = vdwg.mxu0
      %v622 = vxor.u32 %v616, 2147483648
      %v623 = vxor.u32 %v618, 2147483648
      %v624 = vmul.f32 %v622, 1.442695
      %v625 = vpow.pop %v624
      %v626 = vmul.f32 %v623, 1.442695
      %v627 = vpow.pop %v626
      %v628 = vadd.f32 %v625, 1.0
      %v629 = vadd.f32 %v627, 1.0
      %v630 = vrcp.pop %v628
      %v631 = vmul.f32 1.0, %v630
      %v632 = vrcp.pop %v629
      %v633 = vmul.f32 1.0, %v632
      %v634 = vmul.f32 %v616, %v631
      %v635 = vmul.f32 %v618, %v633
      %v638 = vrot.slane %v634, 4
      %v639 = vrot.slane %v635, 4
      %v642 = vld [vmem:[%s5] sm:$0x3]
      %vm643 = vcmp.ge.f32.partialorder %v552, 1.0
      %v644 = vsel %vm643, 1, 0
      %v645 = vlaneseq
      %v646 = vshrl.u32 %v645, 7
      %v647 = vsub.s32 0, %v646
      %v648 = vrot.slane %v644, %v647
      %v649 = vlaneseq
      %v650 = vshrl.u32 %v649, 7
      %v651 = vsub.s32 1, %v650
      %v652 = vrot.slane %v644, %v651
      %vm653 = vcmp.eq.s32.totalorder %v648, 1
      %vm654 = vcmp.eq.s32.totalorder %v652, 1
      %656 = vrot.lane.b32.xlu0 0.0, 17
      %v657 = vpop.permute.xlu0 %656
      %658 = vrot.lane.b32.xlu0 %v638, 17
      %v659 = vpop.permute.xlu0 %658
      %660 = vrot.lane.b32.xlu0 %v639, 17
      %v661 = vpop.permute.xlu0 %660
      %vm662 = vcmask 138240
      %v663 = vsel %vm662, %v657, %v659
      %v664 = vsel %vm662, %v659, %v661
      %v667 = vsel %vm653, %v663, 0.0
      %v668 = vsel %vm654, %v664, 0.0
      %vm669 = vcmp.lt.f32.partialorder %v552, 15.0
      %v670 = vsel %vm669, 1, 0
      %v671 = vlaneseq
      %v672 = vshrl.u32 %v671, 7
      %v673 = vsub.s32 0, %v672
      %v674 = vrot.slane %v670, %v673
      %v675 = vlaneseq
      %v676 = vshrl.u32 %v675, 7
      %v677 = vsub.s32 1, %v676
      %v678 = vrot.slane %v670, %v677
      %vm679 = vcmp.eq.s32.totalorder %v674, 1
      %vm680 = vcmp.eq.s32.totalorder %v678, 1
      %681 = vrot.lane.b32.xlu0 0.0, 15
      %v682 = vpop.permute.xlu0 %681
      %683 = vrot.lane.b32.xlu0 %v638, 15
      %v684 = vpop.permute.xlu0 %683
      %685 = vrot.lane.b32.xlu0 %v639, 15
      %v686 = vpop.permute.xlu0 %685
      %vm687 = vcmask 121856
      %v688 = vsel %vm687, %v682, %v684
      %v689 = vsel %vm687, %v684, %v686
      %v692 = vsel %vm679, %v688, 0.0
      %v693 = vsel %vm680, %v689, 0.0
      %694 = vrot.lane.b32.xlu0 0.0, 1
      %v695 = vpop.permute.xlu0 %694
      %696 = vrot.lane.b32.xlu0 %v638, 1
      %v697 = vpop.permute.xlu0 %696
      %698 = vrot.lane.b32.xlu0 %v639, 1
      %v699 = vpop.permute.xlu0 %698
      %vm700 = vcmask 7168
      %v701 = vsel %vm700, %v695, %v697
      %v702 = vsel %vm700, %v697, %v699
      %v705 = vsel %vm653, %v701, 0.0
      %v706 = vsel %vm654, %v702, 0.0
      %707 = vrot.lane.b32.xlu0 %v638, 127
      %v708 = vpop.permute.xlu0 %707
      %709 = vrot.lane.b32.xlu0 %v639, 127
      %v710 = vpop.permute.xlu0 %709
      %711 = vrot.lane.b32.xlu0 0.0, 127
      %v712 = vpop.permute.xlu0 %711
      %vm713 = vcmask 1039360
      %v714 = vsel %vm713, %v708, %v710
      %v715 = vsel %vm713, %v710, %v712
      %v718 = vsel %vm679, %v714, 0.0
      %v719 = vsel %vm680, %v715, 0.0
      %720 = vrot.lane.b32.xlu0 %v638, 113
      %v721 = vpop.permute.xlu0 %720
      %722 = vrot.lane.b32.xlu0 %v639, 113
      %v723 = vpop.permute.xlu0 %722
      %724 = vrot.lane.b32.xlu0 0.0, 113
      %v725 = vpop.permute.xlu0 %724
      %vm726 = vcmask 924672
      %v727 = vsel %vm726, %v721, %v723
      %v728 = vsel %vm726, %v723, %v725
      %v731 = vsel %vm653, %v727, 0.0
      %v732 = vsel %vm654, %v728, 0.0
      %733 = vrot.lane.b32.xlu0 %v638, 111
      %v734 = vpop.permute.xlu0 %733
      %735 = vrot.lane.b32.xlu0 %v639, 111
      %v736 = vpop.permute.xlu0 %735
      %737 = vrot.lane.b32.xlu0 0.0, 111
      %v738 = vpop.permute.xlu0 %737
      %vm739 = vcmask 908288
      %v740 = vsel %vm739, %v734, %v736
      %v741 = vsel %vm739, %v736, %v738
      %v744 = vsel %vm679, %v740, 0.0
      %v745 = vsel %vm680, %v741, 0.0
      %v746 = vrot.slane 0.0, 4
      %v747 = vrot.slane %v638, 4
      %v748 = vrot.slane %v639, 4
      %749 = vrot.lane.b32.xlu0 %v746, 16
      %v750 = vpop.permute.xlu0 %749
      %751 = vrot.lane.b32.xlu0 %v747, 16
      %v752 = vpop.permute.xlu0 %751
      %753 = vrot.lane.b32.xlu0 %v748, 16
      %v754 = vpop.permute.xlu0 %753
      %vm755 = vcmask 130048
      %v756 = vsel %vm755, %v750, %v752
      %v757 = vsel %vm755, %v752, %v754
      %v762 = vrot.slane %v705, 4
      %v763 = vrot.slane %v706, 4
      %v768 = vrot.slane %v718, 4
      %v769 = vrot.slane %v719, 4
      %772 = vrot.lane.b32.xlu0 %v747, 112
      %v773 = vpop.permute.xlu0 %772
      %774 = vrot.lane.b32.xlu0 %v748, 112
      %v775 = vpop.permute.xlu0 %774
      %776 = vrot.lane.b32.xlu0 %v746, 112
      %v777 = vpop.permute.xlu0 %776
      %vm778 = vcmask 916480
      %v779 = vsel %vm778, %v773, %v775
      %v780 = vsel %vm778, %v775, %v777
      %vm783 = vcmask 1043456
      %v784 = vsel %vm783, %v667, %v756
      %v785 = vsel %vm783, %v668, %v757
      %v786 = vsel %vm783, %v692, %v762
      %v787 = vsel %vm783, %v693, %v763
      %v788 = vsel %vm783, %v638, %v768
      %v789 = vsel %vm783, %v639, %v769
      %v790 = vsel %vm783, %v731, %v779
      %v791 = vsel %vm783, %v732, %v780
      %v792 = vpack.c.bf16 %v786, %v784
      %v793 = vpack.c.bf16 %v787, %v785
      %v794 = vpack.c.bf16 %v790, %v788
      %v795 = vpack.c.bf16 %v791, %v789
      %v796 = vpack.c.bf16 %v744, %v744
      %v797 = vpack.c.bf16 %v745, %v745
      %v798 = vld [vmem:[%s6] sm:$0xf]
      %800 = vset.pattern.permute.xlu0 0
      %801 = vperm.xlu0 %800, %v798
      %v802 = vpop.permute.xlu0 %801
      %vm804 = vcmask 293888
      %v806 = vsel %vm804, %v642, 0
      %v809 = vsel %vm574, %v796, 0
      %v812 = vsel %vm574, %v797, 0
      %814 = vmatprep.subr.bf16.mxu0 %v793
      %815 = vmatpush1.bf16.msra.mxu0 %v792
      %816 = vmatprep.subr.bf16.mxu0 %v795
      %817 = vmatpush1.bf16.msra.mxu0 %v794
      %818 = vmatprep.subr.bf16.mxu0 %v812
      %819 = vmatpush1.bf16.msra.mxu0 %v809
      %820 = vmatprep.subr.bf16.mxu0 0
      %821 = vmatpush1.bf16.msra.mxu0 0
      %822 = vmatprep.subr.bf16.mxu0 0
      %823 = vmatpush1.bf16.msra.mxu0 0
      %824 = vmatprep.subr.bf16.mxu0 0
      %825 = vmatpush1.bf16.msra.mxu0 0
      %826 = vmatprep.subr.bf16.mxu0 0
      %827 = vmatpush1.bf16.msra.mxu0 0
      %828 = vmatprep.subr.bf16.mxu0 0
      %829 = vmatpush1.bf16.msra.mxu0 0
      %830 = vmatprep.subr.bf16.mxu0 0
      %831 = vmatpush1.bf16.msra.mxu0 0
      %832 = vmatprep.subr.bf16.mxu0 0
      %833 = vmatpush1.bf16.msra.mxu0 0
      %834 = vmatprep.subr.bf16.mxu0 0
      %835 = vmatpush1.bf16.msra.mxu0 0
      %836 = vmatprep.subr.bf16.mxu0 0
      %837 = vmatpush1.bf16.msra.mxu0 0
      %838 = vmatprep.subr.bf16.mxu0 0
      %839 = vmatpush1.bf16.msra.mxu0 0
      %840 = vmatprep.subr.bf16.mxu0 0
      %841 = vmatpush1.bf16.msra.mxu0 0
      %842 = vmatprep.subr.bf16.mxu0 0
      %843 = vmatpush1.bf16.msra.mxu0 0
      %844 = vmatprep.subr.bf16.mxu0 0
      %845 = vmatpush1.bf16.msra.mxu0 0
      %846 = vmatprep.mubr.bf16.mxu0 0
      %847 = vmatmul.mubr.bf16.gmra.mrb[0].mxu0 %v806
      %v848 = vpop.f32.mrb[0].mxu0
      %v849 = vadd.f32 %v802, %v848
      %v850 = vpop.f32.mrb[0].mxu0
      %v851 = vadd.f32 %v802, %v850
      %v852 = vpop.f32.mrb[0].mxu0
      %v853 = vpop.f32.mrb[0].mxu0
      %854 = vdwg.mxu0
      %v855 = vxor.u32 %v849, 2147483648
      %v856 = vxor.u32 %v851, 2147483648
      %v857 = vmul.f32 %v855, 1.442695
      %v858 = vpow.pop %v857
      %v859 = vmul.f32 %v856, 1.442695
      %v860 = vpow.pop %v859
      %v861 = vadd.f32 %v858, 1.0
      %v862 = vadd.f32 %v860, 1.0
      %v863 = vrcp.pop %v861
      %v864 = vmul.f32 1.0, %v863
      %v865 = vrcp.pop %v862
      %v866 = vmul.f32 1.0, %v865
      %v867 = vmul.f32 %v849, %v864
      %v868 = vmul.f32 %v851, %v866
      %v869 = vsel %vm783, %v867, 0.0
      %v870 = vsel %vm783, %v868, 0.0
      %v871 = vadd.f32 %v869, %v870
      %872 = vadd.xlane.f32.xlu0 %v871
      %v873 = vpop.xlane.xlu0 %872
      %v874 = vmul.f32 %v873, 0.00390625
      %v875 = vld [vmem:[%s7] sm:$0xf]
      %v878 = vsel %vm570, %v875, 0
      %v880 = vsel %vm783, %v874, 0
      %882 = vmatprep.subr.mxu0 %v880
      %883 = vmatpush1.msra.mxu0 %v880
      %884 = vmatprep.subr.mxu0 0.0
      %885 = vmatpush1.msra.mxu0 0.0
      %886 = vmatprep.subr.mxu0 0.0
      %887 = vmatpush1.msra.mxu0 0.0
      %888 = vmatprep.subr.mxu0 0.0
      %889 = vmatpush1.msra.mxu0 0.0
      %890 = vmatprep.subr.mxu0 0.0
      %891 = vmatpush1.msra.mxu0 0.0
      %892 = vmatprep.subr.mxu0 0.0
      %893 = vmatpush1.msra.mxu0 0.0
      %894 = vmatprep.subr.mxu0 0.0
      %895 = vmatpush1.msra.mxu0 0.0
      %896 = vmatprep.subr.mxu0 0.0
      %897 = vmatpush1.msra.mxu0 0.0
      %898 = vmatprep.subr.mxu0 0.0
      %899 = vmatpush1.msra.mxu0 0.0
      %900 = vmatprep.subr.mxu0 0.0
      %901 = vmatpush1.msra.mxu0 0.0
      %902 = vmatprep.subr.mxu0 0.0
      %903 = vmatpush1.msra.mxu0 0.0
      %904 = vmatprep.subr.mxu0 0.0
      %905 = vmatpush1.msra.mxu0 0.0
      %906 = vmatprep.subr.mxu0 0.0
      %907 = vmatpush1.msra.mxu0 0.0
      %908 = vmatprep.subr.mxu0 0.0
      %909 = vmatpush1.msra.mxu0 0.0
      %910 = vmatprep.subr.mxu0 0.0
      %911 = vmatpush1.msra.mxu0 0.0
      %912 = vmatprep.subr.mxu0 0.0
      %913 = vmatpush1.msra.mxu0 0.0
      %914 = vmatprep.subr.mxu0 0.0
      %915 = vmatpush1.msra.mxu0 0.0
      %916 = vmatprep.subr.mxu0 0.0
      %917 = vmatpush1.msra.mxu0 0.0
      %918 = vmatprep.subr.mxu0 0.0
      %919 = vmatpush1.msra.mxu0 0.0
      %920 = vmatprep.subr.mxu0 0.0
      %921 = vmatpush1.msra.mxu0 0.0
      %922 = vmatprep.subr.mxu0 0.0
      %923 = vmatpush1.msra.mxu0 0.0
      %924 = vmatprep.subr.mxu0 0.0
      %925 = vmatpush1.msra.mxu0 0.0
      %926 = vmatprep.subr.mxu0 0.0
      %927 = vmatpush1.msra.mxu0 0.0
      %928 = vmatprep.subr.mxu0 0.0
      %929 = vmatpush1.msra.mxu0 0.0
      %930 = vmatprep.subr.mxu0 0.0
      %931 = vmatpush1.msra.mxu0 0.0
      %932 = vmatprep.subr.mxu0 0.0
      %933 = vmatpush1.msra.mxu0 0.0
      %934 = vmatprep.subr.mxu0 0.0
      %935 = vmatpush1.msra.mxu0 0.0
      %936 = vmatprep.subr.mxu0 0.0
      %937 = vmatpush1.msra.mxu0 0.0
      %938 = vmatprep.subr.mxu0 0.0
      %939 = vmatpush1.msra.mxu0 0.0
      %940 = vmatprep.subr.mxu0 0.0
      %941 = vmatpush1.msra.mxu0 0.0
      %942 = vmatprep.subr.mxu0 0.0
      %943 = vmatpush1.msra.mxu0 0.0
      %944 = vmatprep.subr.mxu0 0.0
      %945 = vmatpush1.msra.mxu0 0.0
      %946 = vmatprep.mubr.f32.mxu0 0.0
      %947 = vmatmul.mubr.f32.gmra.mrb[0].mxu0 %v878
      %v948 = vpop.f32.mrb[0].mxu0
      %v949 = vadd.f32 0.0, %v948
      %v950 = vpop.f32.mrb[0].mxu0
      %v951 = vadd.f32 0.0, %v950
      %952 = vdwg.mxu0
      %v953 = vadd.f32 %v867, %v949
      %v954 = vadd.f32 %v868, %v951
      %v955 = vld [vmem:[%s8] sm:$0xf]
      %957 = vset.pattern.permute.xlu0 0
      %958 = vperm.xlu0 %957, %v955
      %v959 = vpop.permute.xlu0 %958
      %v961 = vadd.f32 %v953, %v959
      %v962 = vadd.f32 %v954, %v959
      %v963 = vld [vmem:[%s9] sm:$0xf]
      %965 = vset.pattern.permute.xlu0 0
      %966 = vperm.xlu0 %965, %v963
      %v967 = vpop.permute.xlu0 %966
      %v969 = vmul.f32 %v961, %v967
      %v970 = vmul.f32 %v962, %v967
      %v971 = vsel %vm783, %v969, 0.0
      %v972 = vrot.slane %v971, 4
      %v973 = vadd.f32 %v971, %v972
      %v974 = vrot.slane %v973, 2
      %v975 = vadd.f32 %v973, %v974
      %v976 = vrot.slane %v975, 1
      %v977 = vadd.f32 %v975, %v976
      %v978 = vsel %vm783, %v970, 0.0
      %v979 = vrot.slane %v978, 4
      %v980 = vadd.f32 %v978, %v979
      %v981 = vrot.slane %v980, 2
      %v982 = vadd.f32 %v980, %v981
      %v983 = vrot.slane %v982, 1
      %v984 = vadd.f32 %v982, %v983
      %v985 = vld [vmem:[%s2] sm:$0xff]
      %v986 = vld [vmem:[%s2 + $0x8] sm:$0xff]
      %v987 = vld [vmem:[%s2 + $0x10] sm:$0xff]
      %v988 = vld [vmem:[%s2 + $0x18] sm:$0xff]
      %v989 = vld [vmem:[%s2 + $0x20] sm:$0xff]
      %v990 = vld [vmem:[%s2 + $0x28] sm:$0xff]
      %v991 = vld [vmem:[%s2 + $0x30] sm:$0xff]
      %v992 = vld [vmem:[%s2 + $0x38] sm:$0xff]
      %v993 = vld [vmem:[%s2 + $0x40] sm:$0xff]
      %v994 = vld [vmem:[%s2 + $0x48] sm:$0xff]
      %v995 = vld [vmem:[%s2 + $0x50] sm:$0xff]
      %v996 = vld [vmem:[%s2 + $0x58] sm:$0xff]
      %v997 = vld [vmem:[%s2 + $0x60] sm:$0xff]
      %v998 = vld [vmem:[%s2 + $0x68] sm:$0xff]
      %v999 = vld [vmem:[%s2 + $0x70] sm:$0xff]
      %v1000 = vld [vmem:[%s2 + $0x78] sm:$0xff]
      %v1001 = vld [vmem:[%s2 + $0x80] sm:$0xff]
      %v1002 = vld [vmem:[%s2 + $0x88] sm:$0xff]
      %v1003 = vld [vmem:[%s2 + $0x90] sm:$0xff]
      %v1004 = vld [vmem:[%s2 + $0x98] sm:$0xff]
      %v1005 = vld [vmem:[%s2 + $0xa0] sm:$0xff]
      %v1006 = vld [vmem:[%s2 + $0xa8] sm:$0xff]
      %v1007 = vld [vmem:[%s2 + $0xb0] sm:$0xff]
      %v1008 = vld [vmem:[%s2 + $0xb8] sm:$0xff]
      %v1009 = vld [vmem:[%s2 + $0xc0] sm:$0xff]
      %v1010 = vld [vmem:[%s2 + $0xc8] sm:$0xff]
      %v1011 = vld [vmem:[%s2 + $0xd0] sm:$0xff]
      %v1012 = vld [vmem:[%s2 + $0xd8] sm:$0xff]
      %v1013 = vld [vmem:[%s2 + $0xe0] sm:$0xff]
      %v1014 = vld [vmem:[%s2 + $0xe8] sm:$0xff]
      %v1015 = vld [vmem:[%s2 + $0xf0] sm:$0xff]
      %v1016 = vld [vmem:[%s2 + $0xf8] sm:$0xff]
      %v1017 = vld [vmem:[%s2 + $0x100] sm:$0xff]
      %v1018 = vld [vmem:[%s2 + $0x108] sm:$0xff]
      %v1019 = vld [vmem:[%s2 + $0x110] sm:$0xff]
      %v1020 = vld [vmem:[%s2 + $0x118] sm:$0xff]
      %v1021 = vld [vmem:[%s2 + $0x120] sm:$0xff]
      %v1022 = vld [vmem:[%s2 + $0x128] sm:$0xff]
      %v1023 = vld [vmem:[%s2 + $0x130] sm:$0xff]
      %v1024 = vld [vmem:[%s2 + $0x138] sm:$0xff]
      %v1025 = vld [vmem:[%s2 + $0x140] sm:$0xff]
      %v1026 = vld [vmem:[%s2 + $0x148] sm:$0xff]
      %v1027 = vld [vmem:[%s2 + $0x150] sm:$0xff]
      %v1028 = vld [vmem:[%s2 + $0x158] sm:$0xff]
      %v1029 = vld [vmem:[%s2 + $0x160] sm:$0xff]
      %v1030 = vld [vmem:[%s2 + $0x168] sm:$0xff]
      %v1031 = vld [vmem:[%s2 + $0x170] sm:$0xff]
      %v1032 = vld [vmem:[%s2 + $0x178] sm:$0xff]
      %v1033 = vld [vmem:[%s2 + $0x180] sm:$0xff]
      %v1034 = vld [vmem:[%s2 + $0x188] sm:$0xff]
      %v1035 = vld [vmem:[%s2 + $0x190] sm:$0xff]
      %v1036 = vld [vmem:[%s2 + $0x198] sm:$0xff]
      %v1037 = vld [vmem:[%s2 + $0x1a0] sm:$0xff]
      %v1038 = vld [vmem:[%s2 + $0x1a8] sm:$0xff]
      %v1039 = vld [vmem:[%s2 + $0x1b0] sm:$0xff]
      %v1040 = vld [vmem:[%s2 + $0x1b8] sm:$0xff]
      %v1041 = vld [vmem:[%s2 + $0x1c0] sm:$0xff]
      %v1042 = vld [vmem:[%s2 + $0x1c8] sm:$0xff]
      %v1043 = vld [vmem:[%s2 + $0x1d0] sm:$0xff]
      %v1044 = vld [vmem:[%s2 + $0x1d8] sm:$0xff]
      %v1045 = vld [vmem:[%s2 + $0x1e0] sm:$0xff]
      %v1046 = vld [vmem:[%s2 + $0x1e8] sm:$0xff]
      %v1047 = vld [vmem:[%s2 + $0x1f0] sm:$0xff]
      %v1048 = vld [vmem:[%s2 + $0x1f8] sm:$0xff]
      %v1049 = vld [vmem:[#allocation2] sm:$0x1]
      %1051 = vset.pattern.permute.xlu0 0
      %1052 = vperm.xlu0 %1051, %v1049
      %v1053 = vpop.permute.xlu0 %1052
      %v1055 = vlaneseq
      %v1056 = vshrl.u32 %v1055, 7
      %v1057 = vsub.s32 0, %v1056
      %v1058 = vrot.slane %v1053, %v1057
      %1059 = vmatprep.subr.mxu0 %v986
      %1060 = vmatpush1.msra.mxu0 %v985
      %1061 = vmatprep.subr.mxu0 %v988
      %1062 = vmatpush1.msra.mxu0 %v987
      %1063 = vmatprep.subr.mxu0 %v990
      %1064 = vmatpush1.msra.mxu0 %v989
      %1065 = vmatprep.subr.mxu0 %v992
      %1066 = vmatpush1.msra.mxu0 %v991
      %1067 = vmatprep.subr.mxu0 %v994
      %1068 = vmatpush1.msra.mxu0 %v993
      %1069 = vmatprep.subr.mxu0 %v996
      %1070 = vmatpush1.msra.mxu0 %v995
      %1071 = vmatprep.subr.mxu0 %v998
      %1072 = vmatpush1.msra.mxu0 %v997
      %1073 = vmatprep.subr.mxu0 %v1000
      %1074 = vmatpush1.msra.mxu0 %v999
      %1075 = vmatprep.subr.mxu0 %v1002
      %1076 = vmatpush1.msra.mxu0 %v1001
      %1077 = vmatprep.subr.mxu0 %v1004
      %1078 = vmatpush1.msra.mxu0 %v1003
      %1079 = vmatprep.subr.mxu0 %v1006
      %1080 = vmatpush1.msra.mxu0 %v1005
      %1081 = vmatprep.subr.mxu0 %v1008
      %1082 = vmatpush1.msra.mxu0 %v1007
      %1083 = vmatprep.subr.mxu0 %v1010
      %1084 = vmatpush1.msra.mxu0 %v1009
      %1085 = vmatprep.subr.mxu0 %v1012
      %1086 = vmatpush1.msra.mxu0 %v1011
      %1087 = vmatprep.subr.mxu0 %v1014
      %1088 = vmatpush1.msra.mxu0 %v1013
      %1089 = vmatprep.subr.mxu0 %v1016
      %1090 = vmatpush1.msra.mxu0 %v1015
      %1091 = vmatprep.subr.mxu0 %v1018
      %1092 = vmatpush1.msra.mxu0 %v1017
      %1093 = vmatprep.subr.mxu0 %v1020
      %1094 = vmatpush1.msra.mxu0 %v1019
      %1095 = vmatprep.subr.mxu0 %v1022
      %1096 = vmatpush1.msra.mxu0 %v1021
      %1097 = vmatprep.subr.mxu0 %v1024
      %1098 = vmatpush1.msra.mxu0 %v1023
      %1099 = vmatprep.subr.mxu0 %v1026
      %1100 = vmatpush1.msra.mxu0 %v1025
      %1101 = vmatprep.subr.mxu0 %v1028
      %1102 = vmatpush1.msra.mxu0 %v1027
      %1103 = vmatprep.subr.mxu0 %v1030
      %1104 = vmatpush1.msra.mxu0 %v1029
      %1105 = vmatprep.subr.mxu0 %v1032
      %1106 = vmatpush1.msra.mxu0 %v1031
      %1107 = vmatprep.subr.mxu0 %v1034
      %1108 = vmatpush1.msra.mxu0 %v1033
      %1109 = vmatprep.subr.mxu0 %v1036
      %1110 = vmatpush1.msra.mxu0 %v1035
      %1111 = vmatprep.subr.mxu0 %v1038
      %1112 = vmatpush1.msra.mxu0 %v1037
      %1113 = vmatprep.subr.mxu0 %v1040
      %1114 = vmatpush1.msra.mxu0 %v1039
      %1115 = vmatprep.subr.mxu0 %v1042
      %1116 = vmatpush1.msra.mxu0 %v1041
      %1117 = vmatprep.subr.mxu0 %v1044
      %1118 = vmatpush1.msra.mxu0 %v1043
      %1119 = vmatprep.subr.mxu0 %v1046
      %1120 = vmatpush1.msra.mxu0 %v1045
      %1121 = vmatprep.subr.mxu0 %v1048
      %1122 = vmatpush1.msra.mxu0 %v1047
      %1123 = vmatprep.mubr.f32.mxu0 %v984
      %1124 = vmatmul.mubr.f32.gmra.mrb[0].mxu0 %v977
      %v1125 = vpop.f32.mrb[0].mxu0
      %v1126 = vadd.f32 %v1058, %v1125
      %v1127 = vpop.f32.mrb[0].mxu0
      %v1128 = vadd.f32 %v1058, %v1127
      %1129 = vdwg.mxu0
      %v1130 = vld [vmem:[%s11] sm:$0x3]
      %1133 = vrot.lane.b32.xlu0 %v961, 17
      %v1134 = vpop.permute.xlu0 %1133
      %1135 = vrot.lane.b32.xlu0 %v962, 17
      %v1136 = vpop.permute.xlu0 %1135
      %v1137 = vsel %vm662, %v657, %v1134
      %v1138 = vsel %vm662, %v1134, %v1136
      %v1141 = vsel %vm653, %v1137, 0.0
      %v1142 = vsel %vm654, %v1138, 0.0
      %1143 = vrot.lane.b32.xlu0 %v961, 15
      %v1144 = vpop.permute.xlu0 %1143
      %1145 = vrot.lane.b32.xlu0 %v962, 15
      %v1146 = vpop.permute.xlu0 %1145
      %v1147 = vsel %vm687, %v682, %v1144
      %v1148 = vsel %vm687, %v1144, %v1146
      %v1151 = vsel %vm679, %v1147, 0.0
      %v1152 = vsel %vm680, %v1148, 0.0
      %1153 = vrot.lane.b32.xlu0 %v961, 1
      %v1154 = vpop.permute.xlu0 %1153
      %1155 = vrot.lane.b32.xlu0 %v962, 1
      %v1156 = vpop.permute.xlu0 %1155
      %v1157 = vsel %vm700, %v695, %v1154
      %v1158 = vsel %vm700, %v1154, %v1156
      %v1161 = vsel %vm653, %v1157, 0.0
      %v1162 = vsel %vm654, %v1158, 0.0
      %1163 = vrot.lane.b32.xlu0 %v961, 127
      %v1164 = vpop.permute.xlu0 %1163
      %1165 = vrot.lane.b32.xlu0 %v962, 127
      %v1166 = vpop.permute.xlu0 %1165
      %v1167 = vsel %vm713, %v1164, %v1166
      %v1168 = vsel %vm713, %v1166, %v712
      %v1171 = vsel %vm679, %v1167, 0.0
      %v1172 = vsel %vm680, %v1168, 0.0
      %1173 = vrot.lane.b32.xlu0 %v961, 113
      %v1174 = vpop.permute.xlu0 %1173
      %1175 = vrot.lane.b32.xlu0 %v962, 113
      %v1176 = vpop.permute.xlu0 %1175
      %v1177 = vsel %vm726, %v1174, %v1176
      %v1178 = vsel %vm726, %v1176, %v725
      %v1181 = vsel %vm653, %v1177, 0.0
      %v1182 = vsel %vm654, %v1178, 0.0
      %1183 = vrot.lane.b32.xlu0 %v961, 111
      %v1184 = vpop.permute.xlu0 %1183
      %1185 = vrot.lane.b32.xlu0 %v962, 111
      %v1186 = vpop.permute.xlu0 %1185
      %v1187 = vsel %vm739, %v1184, %v1186
      %v1188 = vsel %vm739, %v1186, %v738
      %v1191 = vsel %vm679, %v1187, 0.0
      %v1192 = vsel %vm680, %v1188, 0.0
      %v1193 = vrot.slane %v961, 4
      %v1194 = vrot.slane %v962, 4
      %1195 = vrot.lane.b32.xlu0 %v1193, 16
      %v1196 = vpop.permute.xlu0 %1195
      %1197 = vrot.lane.b32.xlu0 %v1194, 16
      %v1198 = vpop.permute.xlu0 %1197
      %v1199 = vsel %vm755, %v750, %v1196
      %v1200 = vsel %vm755, %v1196, %v1198
      %v1205 = vrot.slane %v1161, 4
      %v1206 = vrot.slane %v1162, 4
      %v1211 = vrot.slane %v1171, 4
      %v1212 = vrot.slane %v1172, 4
      %1215 = vrot.lane.b32.xlu0 %v1193, 112
      %v1216 = vpop.permute.xlu0 %1215
      %1217 = vrot.lane.b32.xlu0 %v1194, 112
      %v1218 = vpop.permute.xlu0 %1217
      %v1219 = vsel %vm778, %v1216, %v1218
      %v1220 = vsel %vm778, %v1218, %v777
      %v1223 = vsel %vm783, %v1141, %v1199
      %v1224 = vsel %vm783, %v1142, %v1200
      %v1225 = vsel %vm783, %v1151, %v1205
      %v1226 = vsel %vm783, %v1152, %v1206
      %v1227 = vsel %vm783, %v961, %v1211
      %v1228 = vsel %vm783, %v962, %v1212
      %v1229 = vsel %vm783, %v1181, %v1219
      %v1230 = vsel %vm783, %v1182, %v1220
      %v1231 = vpack.c.bf16 %v1225, %v1223
      %v1232 = vpack.c.bf16 %v1226, %v1224
      %v1233 = vpack.c.bf16 %v1229, %v1227
      %v1234 = vpack.c.bf16 %v1230, %v1228
      %v1235 = vpack.c.bf16 %v1191, %v1191
      %v1236 = vpack.c.bf16 %v1192, %v1192
      %v1238 = vsel %vm804, %v1130, 0
      %v1241 = vsel %vm574, %v1235, 0
      %v1244 = vsel %vm574, %v1236, 0
      %1246 = vmatprep.subr.bf16.mxu0 %v1232
      %1247 = vmatpush1.bf16.msra.mxu0 %v1231
      %1248 = vmatprep.subr.bf16.mxu0 %v1234
      %1249 = vmatpush1.bf16.msra.mxu0 %v1233
      %1250 = vmatprep.subr.bf16.mxu0 %v1244
      %1251 = vmatpush1.bf16.msra.mxu0 %v1241
      %1252 = vmatprep.subr.bf16.mxu0 0
      %1253 = vmatpush1.bf16.msra.mxu0 0
      %1254 = vmatprep.subr.bf16.mxu0 0
      %1255 = vmatpush1.bf16.msra.mxu0 0
      %1256 = vmatprep.subr.bf16.mxu0 0
      %1257 = vmatpush1.bf16.msra.mxu0 0
      %1258 = vmatprep.subr.bf16.mxu0 0
      %1259 = vmatpush1.bf16.msra.mxu0 0
      %1260 = vmatprep.subr.bf16.mxu0 0
      %1261 = vmatpush1.bf16.msra.mxu0 0
      %1262 = vmatprep.subr.bf16.mxu0 0
      %1263 = vmatpush1.bf16.msra.mxu0 0
      %1264 = vmatprep.subr.bf16.mxu0 0
      %1265 = vmatpush1.bf16.msra.mxu0 0
      %1266 = vmatprep.subr.bf16.mxu0 0
      %1267 = vmatpush1.bf16.msra.mxu0 0
      %1268 = vmatprep.subr.bf16.mxu0 0
      %1269 = vmatpush1.bf16.msra.mxu0 0
      %1270 = vmatprep.subr.bf16.mxu0 0
      %1271 = vmatpush1.bf16.msra.mxu0 0
      %1272 = vmatprep.subr.bf16.mxu0 0
      %1273 = vmatpush1.bf16.msra.mxu0 0
      %1274 = vmatprep.subr.bf16.mxu0 0
      %1275 = vmatpush1.bf16.msra.mxu0 0
      %1276 = vmatprep.subr.bf16.mxu0 0
      %1277 = vmatpush1.bf16.msra.mxu0 0
      %1278 = vmatprep.mubr.bf16.mxu0 0
      %1279 = vmatmul.mubr.bf16.gmra.mrb[0].mxu0 %v1238
      %v1280 = vpop.f32.mrb[0].mxu0
      %v1281 = vadd.f32 0.0, %v1280
      %v1282 = vpop.f32.mrb[0].mxu0
      %v1283 = vadd.f32 0.0, %v1282
      %v1284 = vpop.f32.mrb[0].mxu0
      %v1285 = vpop.f32.mrb[0].mxu0
      %1286 = vdwg.mxu0
      %v1287 = vld [vmem:[%s12] sm:$0x3]
      %vm1288 = vcmp.ge.f32.partialorder %v552, 3.0
      %v1289 = vsel %vm1288, 1, 0
      %v1290 = vlaneseq
      %v1291 = vshrl.u32 %v1290, 7
      %v1292 = vsub.s32 0, %v1291
      %v1293 = vrot.slane %v1289, %v1292
      %v1294 = vlaneseq
      %v1295 = vshrl.u32 %v1294, 7
      %v1296 = vsub.s32 1, %v1295
      %v1297 = vrot.slane %v1289, %v1296
      %vm1298 = vcmp.eq.s32.totalorder %v1293, 1
      %vm1299 = vcmp.eq.s32.totalorder %v1297, 1
      %1300 = vrot.lane.b32.xlu0 0.0, 51
      %v1301 = vpop.permute.xlu0 %1300
      %1302 = vrot.lane.b32.xlu0 %v961, 51
      %v1303 = vpop.permute.xlu0 %1302
      %1304 = vrot.lane.b32.xlu0 %v962, 51
      %v1305 = vpop.permute.xlu0 %1304
      %vm1306 = vcmask 416768
      %v1307 = vsel %vm1306, %v1301, %v1303
      %v1308 = vsel %vm1306, %v1303, %v1305
      %v1311 = vsel %vm1298, %v1307, 0.0
      %v1312 = vsel %vm1299, %v1308, 0.0
      %vm1313 = vcmp.lt.f32.partialorder %v552, 13.0
      %v1314 = vsel %vm1313, 1, 0
      %v1315 = vlaneseq
      %v1316 = vshrl.u32 %v1315, 7
      %v1317 = vsub.s32 0, %v1316
      %v1318 = vrot.slane %v1314, %v1317
      %v1319 = vlaneseq
      %v1320 = vshrl.u32 %v1319, 7
      %v1321 = vsub.s32 1, %v1320
      %v1322 = vrot.slane %v1314, %v1321
      %vm1323 = vcmp.eq.s32.totalorder %v1318, 1
      %vm1324 = vcmp.eq.s32.totalorder %v1322, 1
      %1325 = vrot.lane.b32.xlu0 0.0, 45
      %v1326 = vpop.permute.xlu0 %1325
      %1327 = vrot.lane.b32.xlu0 %v961, 45
      %v1328 = vpop.permute.xlu0 %1327
      %1329 = vrot.lane.b32.xlu0 %v962, 45
      %v1330 = vpop.permute.xlu0 %1329
      %vm1331 = vcmask 367616
      %v1332 = vsel %vm1331, %v1326, %v1328
      %v1333 = vsel %vm1331, %v1328, %v1330
      %v1336 = vsel %vm1323, %v1332, 0.0
      %v1337 = vsel %vm1324, %v1333, 0.0
      %1338 = vrot.lane.b32.xlu0 0.0, 3
      %v1339 = vpop.permute.xlu0 %1338
      %1340 = vrot.lane.b32.xlu0 %v961, 3
      %v1341 = vpop.permute.xlu0 %1340
      %1342 = vrot.lane.b32.xlu0 %v962, 3
      %v1343 = vpop.permute.xlu0 %1342
      %vm1344 = vcmask 23552
      %v1345 = vsel %vm1344, %v1339, %v1341
      %v1346 = vsel %vm1344, %v1341, %v1343
      %v1349 = vsel %vm1298, %v1345, 0.0
      %v1350 = vsel %vm1299, %v1346, 0.0
      %1351 = vrot.lane.b32.xlu0 %v961, 125
      %v1352 = vpop.permute.xlu0 %1351
      %1353 = vrot.lane.b32.xlu0 %v962, 125
      %v1354 = vpop.permute.xlu0 %1353
      %1355 = vrot.lane.b32.xlu0 0.0, 125
      %v1356 = vpop.permute.xlu0 %1355
      %vm1357 = vcmask 1022976
      %v1358 = vsel %vm1357, %v1352, %v1354
      %v1359 = vsel %vm1357, %v1354, %v1356
      %v1362 = vsel %vm1323, %v1358, 0.0
      %v1363 = vsel %vm1324, %v1359, 0.0
      %1364 = vrot.lane.b32.xlu0 %v961, 83
      %v1365 = vpop.permute.xlu0 %1364
      %1366 = vrot.lane.b32.xlu0 %v962, 83
      %v1367 = vpop.permute.xlu0 %1366
      %1368 = vrot.lane.b32.xlu0 0.0, 83
      %v1369 = vpop.permute.xlu0 %1368
      %vm1370 = vcmask 678912
      %v1371 = vsel %vm1370, %v1365, %v1367
      %v1372 = vsel %vm1370, %v1367, %v1369
      %v1375 = vsel %vm1298, %v1371, 0.0
      %v1376 = vsel %vm1299, %v1372, 0.0
      %1377 = vrot.lane.b32.xlu0 %v961, 77
      %v1378 = vpop.permute.xlu0 %1377
      %1379 = vrot.lane.b32.xlu0 %v962, 77
      %v1380 = vpop.permute.xlu0 %1379
      %1381 = vrot.lane.b32.xlu0 0.0, 77
      %v1382 = vpop.permute.xlu0 %1381
      %vm1383 = vcmask 629760
      %v1384 = vsel %vm1383, %v1378, %v1380
      %v1385 = vsel %vm1383, %v1380, %v1382
      %v1388 = vsel %vm1323, %v1384, 0.0
      %v1389 = vsel %vm1324, %v1385, 0.0
      %1390 = vrot.lane.b32.xlu0 %v746, 48
      %v1391 = vpop.permute.xlu0 %1390
      %1392 = vrot.lane.b32.xlu0 %v1193, 48
      %v1393 = vpop.permute.xlu0 %1392
      %1394 = vrot.lane.b32.xlu0 %v1194, 48
      %v1395 = vpop.permute.xlu0 %1394
      %vm1396 = vcmask 392192
      %v1397 = vsel %vm1396, %v1391, %v1393
      %v1398 = vsel %vm1396, %v1393, %v1395
      %v1403 = vrot.slane %v1349, 4
      %v1404 = vrot.slane %v1350, 4
      %v1409 = vrot.slane %v1362, 4
      %v1410 = vrot.slane %v1363, 4
      %1413 = vrot.lane.b32.xlu0 %v1193, 80
      %v1414 = vpop.permute.xlu0 %1413
      %1415 = vrot.lane.b32.xlu0 %v1194, 80
      %v1416 = vpop.permute.xlu0 %1415
      %1417 = vrot.lane.b32.xlu0 %v746, 80
      %v1418 = vpop.permute.xlu0 %1417
      %vm1419 = vcmask 654336
      %v1420 = vsel %vm1419, %v1414, %v1416
      %v1421 = vsel %vm1419, %v1416, %v1418
      %v1424 = vsel %vm783, %v1311, %v1397
      %v1425 = vsel %vm783, %v1312, %v1398
      %v1426 = vsel %vm783, %v1336, %v1403
      %v1427 = vsel %vm783, %v1337, %v1404
      %v1428 = vsel %vm783, %v961, %v1409
      %v1429 = vsel %vm783, %v962, %v1410
      %v1430 = vsel %vm783, %v1375, %v1420
      %v1431 = vsel %vm783, %v1376, %v1421
      %v1432 = vpack.c.bf16 %v1426, %v1424
      %v1433 = vpack.c.bf16 %v1427, %v1425
      %v1434 = vpack.c.bf16 %v1430, %v1428
      %v1435 = vpack.c.bf16 %v1431, %v1429
      %v1436 = vpack.c.bf16 %v1388, %v1388
      %v1437 = vpack.c.bf16 %v1389, %v1389
      %v1439 = vsel %vm804, %v1287, 0
      %v1442 = vsel %vm574, %v1436, 0
      %v1445 = vsel %vm574, %v1437, 0
      %1447 = vmatprep.subr.bf16.mxu0 %v1433
      %1448 = vmatpush1.bf16.msra.mxu0 %v1432
      %1449 = vmatprep.subr.bf16.mxu0 %v1435
      %1450 = vmatpush1.bf16.msra.mxu0 %v1434
      %1451 = vmatprep.subr.bf16.mxu0 %v1445
      %1452 = vmatpush1.bf16.msra.mxu0 %v1442
      %1453 = vmatprep.subr.bf16.mxu0 0
      %1454 = vmatpush1.bf16.msra.mxu0 0
      %1455 = vmatprep.subr.bf16.mxu0 0
      %1456 = vmatpush1.bf16.msra.mxu0 0
      %1457 = vmatprep.subr.bf16.mxu0 0
      %1458 = vmatpush1.bf16.msra.mxu0 0
      %1459 = vmatprep.subr.bf16.mxu0 0
      %1460 = vmatpush1.bf16.msra.mxu0 0
      %1461 = vmatprep.subr.bf16.mxu0 0
      %1462 = vmatpush1.bf16.msra.mxu0 0
      %1463 = vmatprep.subr.bf16.mxu0 0
      %1464 = vmatpush1.bf16.msra.mxu0 0
      %1465 = vmatprep.subr.bf16.mxu0 0
      %1466 = vmatpush1.bf16.msra.mxu0 0
      %1467 = vmatprep.subr.bf16.mxu0 0
      %1468 = vmatpush1.bf16.msra.mxu0 0
      %1469 = vmatprep.subr.bf16.mxu0 0
      %1470 = vmatpush1.bf16.msra.mxu0 0
      %1471 = vmatprep.subr.bf16.mxu0 0
      %1472 = vmatpush1.bf16.msra.mxu0 0
      %1473 = vmatprep.subr.bf16.mxu0 0
      %1474 = vmatpush1.bf16.msra.mxu0 0
      %1475 = vmatprep.subr.bf16.mxu0 0
      %1476 = vmatpush1.bf16.msra.mxu0 0
      %1477 = vmatprep.subr.bf16.mxu0 0
      %1478 = vmatpush1.bf16.msra.mxu0 0
      %1479 = vmatprep.mubr.bf16.mxu0 0
      %1480 = vmatmul.mubr.bf16.gmra.mrb[0].mxu0 %v1439
      %v1481 = vpop.f32.mrb[0].mxu0
      %v1482 = vadd.f32 0.0, %v1481
      %v1483 = vpop.f32.mrb[0].mxu0
      %v1484 = vadd.f32 0.0, %v1483
      %v1485 = vpop.f32.mrb[0].mxu0
      %v1486 = vpop.f32.mrb[0].mxu0
      %1487 = vdwg.mxu0
      %v1488 = vsub.f32 %v1281, %v1482
      %v1489 = vsub.f32 %v1283, %v1484
      %v1490 = vlaneseq
      %v1491 = vshrl.u32 %v1490, 7
      %v1492 = vsub.s32 0, %v1491
      %v1493 = vrot.slane %v1126, %v1492
      %v1494 = vlaneseq
      %v1495 = vshrl.u32 %v1494, 7
      %v1496 = vsub.s32 0, %v1495
      %v1497 = vrot.slane %v1128, %v1496
      %v1498 = vmul.f32 %v1493, %v1488
      %v1499 = vmul.f32 %v1497, %v1489
      %v1500 = vadd.f32 %v1482, %v1498
      %v1501 = vadd.f32 %v1484, %v1499
      %v1502 = vsel %vm783, %v1500, 0.0
      %v1503 = vsel %vm783, %v1501, 0.0
      %v1504 = vadd.f32 %v1502, %v1503
      %1505 = vadd.xlane.f32.xlu0 %v1504
      %v1506 = vpop.xlane.xlu0 %1505
      %v1507 = vmul.f32 %v1506, 0.00390625
      %v1508 = vld [vmem:[%s13] sm:$0xf]
      %v1511 = vsel %vm570, %v1508, 0
      %v1513 = vsel %vm783, %v1507, 0
      %1515 = vmatprep.subr.mxu0 %v1513
      %1516 = vmatpush1.msra.mxu0 %v1513
      %1517 = vmatprep.subr.mxu0 0.0
      %1518 = vmatpush1.msra.mxu0 0.0
      %1519 = vmatprep.subr.mxu0 0.0
      %1520 = vmatpush1.msra.mxu0 0.0
      %1521 = vmatprep.subr.mxu0 0.0
      %1522 = vmatpush1.msra.mxu0 0.0
      %1523 = vmatprep.subr.mxu0 0.0
      %1524 = vmatpush1.msra.mxu0 0.0
      %1525 = vmatprep.subr.mxu0 0.0
      %1526 = vmatpush1.msra.mxu0 0.0
      %1527 = vmatprep.subr.mxu0 0.0
      %1528 = vmatpush1.msra.mxu0 0.0
      %1529 = vmatprep.subr.mxu0 0.0
      %1530 = vmatpush1.msra.mxu0 0.0
      %1531 = vmatprep.subr.mxu0 0.0
      %1532 = vmatpush1.msra.mxu0 0.0
      %1533 = vmatprep.subr.mxu0 0.0
      %1534 = vmatpush1.msra.mxu0 0.0
      %1535 = vmatprep.subr.mxu0 0.0
      %1536 = vmatpush1.msra.mxu0 0.0
      %1537 = vmatprep.subr.mxu0 0.0
      %1538 = vmatpush1.msra.mxu0 0.0
      %1539 = vmatprep.subr.mxu0 0.0
      %1540 = vmatpush1.msra.mxu0 0.0
      %1541 = vmatprep.subr.mxu0 0.0
      %1542 = vmatpush1.msra.mxu0 0.0
      %1543 = vmatprep.subr.mxu0 0.0
      %1544 = vmatpush1.msra.mxu0 0.0
      %1545 = vmatprep.subr.mxu0 0.0
      %1546 = vmatpush1.msra.mxu0 0.0
      %1547 = vmatprep.subr.mxu0 0.0
      %1548 = vmatpush1.msra.mxu0 0.0
      %1549 = vmatprep.subr.mxu0 0.0
      %1550 = vmatpush1.msra.mxu0 0.0
      %1551 = vmatprep.subr.mxu0 0.0
      %1552 = vmatpush1.msra.mxu0 0.0
      %1553 = vmatprep.subr.mxu0 0.0
      %1554 = vmatpush1.msra.mxu0 0.0
      %1555 = vmatprep.subr.mxu0 0.0
      %1556 = vmatpush1.msra.mxu0 0.0
      %1557 = vmatprep.subr.mxu0 0.0
      %1558 = vmatpush1.msra.mxu0 0.0
      %1559 = vmatprep.subr.mxu0 0.0
      %1560 = vmatpush1.msra.mxu0 0.0
      %1561 = vmatprep.subr.mxu0 0.0
      %1562 = vmatpush1.msra.mxu0 0.0
      %1563 = vmatprep.subr.mxu0 0.0
      %1564 = vmatpush1.msra.mxu0 0.0
      %1565 = vmatprep.subr.mxu0 0.0
      %1566 = vmatpush1.msra.mxu0 0.0
      %1567 = vmatprep.subr.mxu0 0.0
      %1568 = vmatpush1.msra.mxu0 0.0
      %1569 = vmatprep.subr.mxu0 0.0
      %1570 = vmatpush1.msra.mxu0 0.0
      %1571 = vmatprep.subr.mxu0 0.0
      %1572 = vmatpush1.msra.mxu0 0.0
      %1573 = vmatprep.subr.mxu0 0.0
      %1574 = vmatpush1.msra.mxu0 0.0
      %1575 = vmatprep.subr.mxu0 0.0
      %1576 = vmatpush1.msra.mxu0 0.0
      %1577 = vmatprep.subr.mxu0 0.0
      %1578 = vmatpush1.msra.mxu0 0.0
      %1579 = vmatprep.mubr.f32.mxu0 0.0
      %1580 = vmatmul.mubr.f32.gmra.mrb[0].mxu0 %v1511
      %v1581 = vpop.f32.mrb[0].mxu0
      %v1582 = vadd.f32 0.0, %v1581
      %v1583 = vpop.f32.mrb[0].mxu0
      %v1584 = vadd.f32 0.0, %v1583
      %1585 = vdwg.mxu0
      %v1586 = vadd.f32 %v1500, %v1582
      %v1587 = vadd.f32 %v1501, %v1584
      %v1588 = vld [vmem:[%s14] sm:$0xf]
      %1590 = vset.pattern.permute.xlu0 0
      %1591 = vperm.xlu0 %1590, %v1588
      %v1592 = vpop.permute.xlu0 %1591
      %v1594 = vadd.f32 %v1586, %v1592
      %v1595 = vadd.f32 %v1587, %v1592
      %v1596 = vpack.c.bf16 %v1594, %v634
      %v1597 = vpack.c.bf16 %v1595, %v635
      %v1598 = vld [vmem:[%s15] sm:$0xf]
      %v1599 = vld [vmem:[%s16] sm:$0xff]
      %1601 = vset.pattern.permute.xlu0 0
      %1602 = vperm.xlu0 %1601, %v1599
      %v1603 = vpop.permute.xlu0 %1602
      %vm1605 = vcmask 97280
      %v1607 = vsel %vm1605, %v1598, 0
      %vm1609 = vcmask 1045504
      %v1611 = vsel %vm1609, %v1596, 0
      %v1614 = vsel %vm1609, %v1597, 0
      %1616 = vmatprep.subr.bf16.mxu0 %v1614
      %1617 = vmatpush1.bf16.msra.mxu0 %v1611
      %1618 = vmatprep.subr.bf16.mxu0 0
      %1619 = vmatpush1.bf16.msra.mxu0 0
      %1620 = vmatprep.subr.bf16.mxu0 0
      %1621 = vmatpush1.bf16.msra.mxu0 0
      %1622 = vmatprep.subr.bf16.mxu0 0
      %1623 = vmatpush1.bf16.msra.mxu0 0
      %1624 = vmatprep.subr.bf16.mxu0 0
      %1625 = vmatpush1.bf16.msra.mxu0 0
      %1626 = vmatprep.subr.bf16.mxu0 0
      %1627 = vmatpush1.bf16.msra.mxu0 0
      %1628 = vmatprep.subr.bf16.mxu0 0
      %1629 = vmatpush1.bf16.msra.mxu0 0
      %1630 = vmatprep.subr.bf16.mxu0 0
      %1631 = vmatpush1.bf16.msra.mxu0 0
      %1632 = vmatprep.subr.bf16.mxu0 0
      %1633 = vmatpush1.bf16.msra.mxu0 0
      %1634 = vmatprep.subr.bf16.mxu0 0
      %1635 = vmatpush1.bf16.msra.mxu0 0
      %1636 = vmatprep.subr.bf16.mxu0 0
      %1637 = vmatpush1.bf16.msra.mxu0 0
      %1638 = vmatprep.subr.bf16.mxu0 0
      %1639 = vmatpush1.bf16.msra.mxu0 0
      %1640 = vmatprep.subr.bf16.mxu0 0
      %1641 = vmatpush1.bf16.msra.mxu0 0
      %1642 = vmatprep.subr.bf16.mxu0 0
      %1643 = vmatpush1.bf16.msra.mxu0 0
      %1644 = vmatprep.subr.bf16.mxu0 0
      %1645 = vmatpush1.bf16.msra.mxu0 0
      %1646 = vmatprep.subr.bf16.mxu0 0
      %1647 = vmatpush1.bf16.msra.mxu0 0
      %1648 = vmatprep.mubr.bf16.mxu0 0
      %1649 = vmatmul.mubr.bf16.gmra.mrb[0].mxu0 %v1607
      %v1650 = vpop.f32.mrb[0].mxu0
      %v1651 = vadd.f32 %v1603, %v1650
      %v1652 = vpop.f32.mrb[0].mxu0
      %v1653 = vadd.f32 %v1603, %v1652
      %v1654 = vpop.f32.mrb[0].mxu0
      %v1655 = vpop.f32.mrb[0].mxu0
      %1656 = vdwg.mxu0
      %v1657 = vxor.u32 %v1651, 2147483648
      %v1658 = vxor.u32 %v1653, 2147483648
      %v1659 = vmul.f32 %v1657, 1.442695
      %v1660 = vpow.pop %v1659
      %v1661 = vmul.f32 %v1658, 1.442695
      %v1662 = vpow.pop %v1661
      %v1663 = vadd.f32 %v1660, 1.0
      %v1664 = vadd.f32 %v1662, 1.0
      %v1665 = vrcp.pop %v1663
      %v1666 = vmul.f32 1.0, %v1665
      %v1667 = vrcp.pop %v1664
      %v1668 = vmul.f32 1.0, %v1667
      %v1669 = vmul.f32 %v1651, %v1666
      %v1670 = vmul.f32 %v1653, %v1668
      %1671 = vst [vmem:[%s550] sm:$0xff] %v1669
      %1672 = vst [vmem:[%s550 + $0x8] sm:$0xff] %v1670
      %p1673 = scmp.lt.s32.totalorder %s30, 1
      %s1674 = scalar_select %p1673, %s30, 1
      %s1675 = smul.addr %s1674, 2
      %s1676 = smul.addr %s1675, 8
      %s1677 = scalar_lea.vmem %s17, %s1676
      // Predicated region
      $region89: #{c2f_saconv2d_forward.1} parent=87 // pred_check
        %p1678 = pneg %p410
      $region90: #{c2f_saconv2d_forward.1} parent=87 // pred_check_branch
        %1680 = sbr.rel (%p1678) target = $region92
      $region91: #{c2f_saconv2d_forward.1} parent=87 // pred_region
        _
      $region92: #{c2f_saconv2d_forward.1} parent=87 // pred_fallthru
        _
    $region88: #{c2f_saconv2d_forward.1} parent=5 // pred_fallthru
      _
    %p1681 = scmp.le.s32.totalorder 2, %s25
    // Predicated region
    $region93: #{c2f_saconv2d_forward.1} parent=5 // pred_check
      %p1682 = pneg %p1681
    $region94: #{c2f_saconv2d_forward.1} parent=5 // pred_check_branch
      %1684 = sbr.rel (%p1682) target = $region96
    $region95: #{c2f_saconv2d_forward.1} parent=5 // pred_region
      %s1685 = ssub.s32 %s25, 2
      // Predicated region
      $region97: #{c2f_saconv2d_forward.1} parent=95 // pred_check
        %p1686 = pneg %p416
      $region98: #{c2f_saconv2d_forward.1} parent=95 // pred_check_branch
        %1688 = sbr.rel (%p1686) target = $region100
      $region99: #{c2f_saconv2d_forward.1} parent=95 // pred_region
        %p1689 = scmp.lt.s32.totalorder %s31, 1
        %s1690 = scalar_select %p1689, %s31, 1
        %s1691 = smul.addr %s1690, 2
        %s1692 = smul.addr %s1691, 8
        %s1693 = scalar_lea.vmem %s17, %s1692
      $region100: #{c2f_saconv2d_forward.1} parent=95 // pred_fallthru
        _
    $region96: #{c2f_saconv2d_forward.1} parent=5 // pred_fallthru
      _
  $region6: #{c2f_saconv2d_forward.1} parent=0 // loop_footer
    %s29 = sadd.s32 1, %s25
  $region7: #{c2f_saconv2d_forward.1} parent=0 // loop_footer_branch
    %24 = sbr.rel target = $region3
  $region8: #{c2f_saconv2d_forward.1} parent=0 // loop_exit
    _

</llo_original>
